<compile_context>
chip_gen: v7x
topology: tpu7x:2x2x1
jax: 0.10.0
libtpu: 0.0.40
codegen_flags: <defaults>
</compile_context>

<pallas_src>
import functools

import numpy as np
import jax
import jax.numpy as jnp
from jax.experimental import pallas as pl
from jax.experimental.pallas import tpu as pltpu


def _gaussian_1d(win_size, sigma):
    # Matches the torch source exactly: exp(-0.5*(xx^2+yy^2)/(2*sigma^2))
    # separates into exp(-0.5*d^2/(2*sigma^2)) 1D factors.
    h = win_size // 2
    d = np.arange(-h, h + 1, dtype=np.float32)
    return np.exp(-0.5 * (d ** 2) / (2.0 * sigma ** 2)).astype(np.float32)


def get_gaussian_filter_np(n_channels, win_size, sigma):
    """Replica of torch get_gaussian_filter (normalization over ALL channel
    copies, so each per-channel 2D window sums to 1 / n_channels)."""
    g1 = _gaussian_1d(win_size, sigma)
    g2 = np.outer(g1, g1)
    g = np.tile(g2[None, None], (n_channels, 1, 1, 1))        # (C, 1, win, win)
    return (g / g.sum()).astype(np.float32)


def _toeplitz_replicate(n, taps):
    """T[out, in]: 1D correlation with `taps` where replicate (edge) padding is
    folded into clamped boundary columns, so conv1d_replicate(x) == T @ x."""
    win = taps.shape[0]
    pad = win // 2
    T = np.zeros((n, n), np.float32)
    for i in range(n):
        for d in range(win):
            j = min(max(i + d - pad, 0), n - 1)
            T[i, j] += taps[d]
    return T


def _ssim_kernel(th_ref, twT_ref, x1_ref, x2_ref, o_ref, *, nb, approx, blur_dtype):
    # Single resident copies of the blur operators — reused by every matmul
    # below (no jnp.broadcast_to, no batched einsum).
    th = th_ref[...].astype(blur_dtype)       # (H, H)   row-pass Toeplitz
    twT = twT_ref[...].astype(blur_dtype)     # (Wl, Wl) col-pass Toeplitz^T (block-diag)

    C1 = 0.01 ** 2
    C2 = 0.03 ** 2

    def blur(m):
        # Separable Gaussian blur with replicate padding as two MXU matmuls:
        #   column (lane) pass: m @ Tw^T, then row (sublane) pass: Th @ (.)
        a = jnp.dot(m.astype(blur_dtype), twT, preferred_element_type=jnp.float32)
        return jnp.dot(th, a.astype(blur_dtype), preferred_element_type=jnp.float32)

    for p in range(nb):                       # unrolled; nb is kept small (<= 8)
        x1 = x1_ref[p]                        # (H, Wl) f32
        x2 = x2_ref[p]

        mu1 = blur(x1)
        mu2 = blur(x2)
        e11 = blur(x1 * x1)
        e22 = blur(x2 * x2)
        e12 = blur(x1 * x2)

        mu1_sq = mu1 * mu1
        mu2_sq = mu2 * mu2
        mu1_mu2 = mu1 * mu2
        sigma1_sq = jnp.abs(e11 - mu1_sq)
        sigma2_sq = jnp.abs(e22 - mu2_sq)
        sigma12 = e12 - mu1_mu2

        num = (2.0 * mu1_mu2 + C1) * (2.0 * sigma12 + C2)
        den = (mu1_sq + mu2_sq + C1) * (sigma1_sq + sigma2_sq + C2)
        ssim = num * pl.reciprocal(den, approx=approx)

        s = jnp.clip(ssim, -1.0, 1.0)
        o_ref[p] = (1.0 - (s + 1.0) * 0.5).astype(o_ref.dtype)


def _vmem_params():
    """Generation-aware VMEM limit and block-size budget."""
    cap = 64 << 20                                    # conservative default (v7x per-TC)
    try:
        cap = int(pltpu.get_tpu_info().vmem_capacity_bytes)
    except Exception:
        pass
    limit = min((cap * 3) // 4, cap - (8 << 20))      # 48 MiB on v7x, 96 MiB on v5e/v6e
    budget = (cap * 3) // 10                          # ~19 MiB on v7x, ~38 MiB on 128 MiB parts
    return limit, budget


def _choose_block_planes(n_folded, H, Wl, budget_bytes, max_nb=8):
    plane = H * Wl * 4
    per_plane = 6 * plane                    # x1/x2 blocks (double-buffered) + out block
    fixed = 20 * plane + 8 * (H * H + Wl * Wl)   # per-plane transients + Th/Tw^T worst case
    avail = max(budget_bytes - fixed, per_plane)
    return int(max(1, min(max_nb, n_folded, avail // per_plane)))


def _fold_lanes(x, n_super, g, H, W):
    if g == 1:
        return x
    return (x.reshape(n_super, g, H, W).transpose(0, 2, 1, 3)
             .reshape(n_super, H, g * W))


def _unfold_lanes(y, n_super, g, H, W):
    if g == 1:
        return y
    return (y.reshape(n_super, H, g, W).transpose(0, 2, 1, 3)
             .reshape(n_super * g, H, W))


def sim_score_ssim(batch1, batch2, *, n_channels, win_size, reduction=False,
                   approx_reciprocal=True, blur_dtype=jnp.float32):
    """Forward pass of SimScore_SSIM (reduction=False path)."""
    # TODO(synk): reduction=True path (spatial/channel mean + batch sum) not implemented.
    # TODO(synk): for very large planes (>~512x512 on v7x) add a second grid axis that
    # row-tiles Th into (tile_H, H) blocks and the output into (nb, tile_H, Wl) so the
    # per-step working set is bounded without halo bookkeeping.
    assert not reduction
    assert batch1.shape == batch2.shape
    B, C, H, W = batch1.shape
    assert C == n_channels

    sigma = win_size / 7
    g1 = _gaussian_1d(win_size, sigma)
    S = float(g1.sum())
    # Split the torch normalization (sum over ALL channel copies) across the two
    # separable 1D factors:  row[dy] * col[dx] == g2d[dy, dx] / (C * S^2).
    row_taps = g1 / S
    col_taps = g1 / (S * n_channels)

    # Lane folding: pack g planes side-by-side in the lane axis when W < 128.
    g = max(1, 128 // W) if W < 128 else 1
    Wl = g * W

    th = jnp.asarray(_toeplitz_replicate(H, row_taps))            # (H, H)
    tw = _toeplitz_replicate(W, col_taps)                          # (W, W)
    twT_np = np.zeros((Wl, Wl), np.float32)
    for b in range(g):                                             # block-diagonal Tw^T
        twT_np[b * W:(b + 1) * W, b * W:(b + 1) * W] = tw.T
    twT = jnp.asarray(twT_np)

    N = B * C
    n_folded = -(-N // g)                      # super-planes before block padding

    vmem_limit, budget = _vmem_params()
    nb = _choose_block_planes(n_folded, H, Wl, budget)
    if n_folded >= 2:                          # keep >= 2 grid steps (pipelining / megacore)
        nb = min(nb, -(-n_folded // 2))
    steps = -(-n_folded // nb)
    nb = -(-n_folded // steps)                 # re-balance nb to minimize padding
    # Prefer an even number of parallel grid steps (v7x megacore balance) but only
    # when it adds no extra padded planes (padding is pure waste on 1-TC v5e/v6e).
    if steps > 1 and steps % 2 == 1:
        steps2 = steps + 1
        nb2 = -(-n_folded // steps2)
        if steps2 * nb2 <= steps * nb:
            steps, nb = steps2, nb2
    n_super = steps * nb                       # padded super-plane count
    N_pad = n_super * g

    x1 = batch1.astype(jnp.float32).reshape(N, H, W)
    x2 = batch2.astype(jnp.float32).reshape(N, H, W)
    if N_pad > N:                              # zero planes, sliced off after the call
        pad = ((0, N_pad - N), (0, 0), (0, 0))
        x1 = jnp.pad(x1, pad)
        x2 = jnp.pad(x2, pad)
    x1f = _fold_lanes(x1, n_super, g, H, W)    # (n_super, H, Wl) lane-dense
    x2f = _fold_lanes(x2, n_super, g, H, W)

    kernel = functools.partial(_ssim_kernel, nb=nb, approx=approx_reciprocal,
                               blur_dtype=jnp.dtype(blur_dtype))

    def _call(single_buffer_consts):
        const_kw = {"pipeline_mode": pl.Buffered(1)} if single_buffer_consts else {}
        in_specs = [
            pl.BlockSpec((H, H), lambda n: (0, 0), **const_kw),      # Th  (resident)
            pl.BlockSpec((Wl, Wl), lambda n: (0, 0), **const_kw),    # Tw^T (resident)
            pl.BlockSpec((nb, H, Wl), lambda n: (n, 0, 0)),
            pl.BlockSpec((nb, H, Wl), lambda n: (n, 0, 0)),
        ]
        out_spec = pl.BlockSpec((nb, H, Wl), lambda n: (n, 0, 0))
        return pl.pallas_call(
            kernel,
            out_shape=jax.ShapeDtypeStruct((n_super, H, Wl), jnp.float32),
            grid_spec=pltpu.PrefetchScalarGridSpec(
                num_scalar_prefetch=0,
                grid=(steps,),
                in_specs=in_specs,
                out_specs=out_spec),
            compiler_params=pltpu.CompilerParams(
                dimension_semantics=("parallel",),
                vmem_limit_bytes=vmem_limit),
        )(th, twT, x1f, x2f)

    try:
        out = _call(True)
    except Exception:
        # pipeline_mode=pl.Buffered(1) unsupported on this jax/libtpu combination:
        # fall back to default (double-buffered) constant operands.
        out = _call(False)

    out = _unfold_lanes(out, n_super, g, H, W)[:N]
    return out.reshape(B, C, H, W)


def _reference_jax(batch1, batch2, *, n_channels, win_size):
    """Pure-JAX reference mirroring the PyTorch forward (for sanity check)."""
    sigma = win_size / 7
    g = get_gaussian_filter_np(n_channels, win_size, sigma)
    w2d = jnp.asarray(g[0, 0])
    pad = win_size // 2
    B, C, H, W = batch1.shape

    def conv(x):
        xp = jnp.pad(x, ((0, 0), (0, 0), (pad, pad), (pad, pad)), mode="edge")
        acc = jnp.zeros((B, C, H, W), jnp.float32)
        for dy in range(win_size):
            for dx in range(win_size):
                acc = acc + w2d[dy, dx] * xp[:, :, dy:dy + H, dx:dx + W]
        return acc

    mu1, mu2 = conv(batch1), conv(batch2)
    mu1_sq, mu2_sq, mu1_mu2 = mu1 * mu1, mu2 * mu2, mu1 * mu2
    sigma1_sq = jnp.abs(conv(batch1 * batch1) - mu1_sq)
    sigma2_sq = jnp.abs(conv(batch2 * batch2) - mu2_sq)
    sigma12 = conv(batch1 * batch2) - mu1_mu2
    C1, C2 = 0.01 ** 2, 0.03 ** 2
    ssim = ((2 * mu1_mu2 + C1) * (2 * sigma12 + C2)) / (
        (mu1_sq + mu2_sq + C1) * (sigma1_sq + sigma2_sq + C2))
    s = jnp.clip(ssim, -1.0, 1.0)
    return 1.0 - (s + 1.0) / 2.0


if __name__ == "__main__":
    key = jax.random.PRNGKey(0)
    k1, k2, k3, k4 = jax.random.split(key, 4)
    B, C, H, W = 2, 4, 16, 16
    win_size = 5

    batch1 = jax.random.normal(k1, (B, C, H, W), dtype=jnp.float32)
    batch2 = jax.random.normal(k2, (B, C, H, W), dtype=jnp.float32)
    ref = _reference_jax(batch1, batch2, n_channels=C, win_size=win_size)

    # Exact path (f32 matmuls, exact divide): tight check of the Toeplitz blur
    # with replicate padding + lane folding.
    out_exact = jax.block_until_ready(
        sim_score_ssim(batch1, batch2, n_channels=C, win_size=win_size,
                       approx_reciprocal=False))
    np.testing.assert_allclose(np.asarray(out_exact), np.asarray(ref),
                               rtol=1e-5, atol=2e-5)

    # Default fast path (EUP approximate reciprocal): looser tolerance.
    out_fast = jax.block_until_ready(
        sim_score_ssim(batch1, batch2, n_channels=C, win_size=win_size))
    np.testing.assert_allclose(np.asarray(out_fast), np.asarray(ref),
                               rtol=1e-2, atol=1e-2)

    # bf16 matmul operands (f32 accumulation), validated against the exact path.
    out_bf16 = jax.block_until_ready(
        sim_score_ssim(batch1, batch2, n_channels=C, win_size=win_size,
                       approx_reciprocal=False, blur_dtype=jnp.bfloat16))
    np.testing.assert_allclose(np.asarray(out_bf16), np.asarray(ref),
                               rtol=5e-2, atol=5e-2)

    # Awkward N (prime) + W not dividing 128: exercises zero-plane padding and
    # the non-128 lane-fold / block-diagonal Tw^T path.
    B2, C2, H2, W2 = 1, 3, 16, 24
    b1 = jax.random.normal(k3, (B2, C2, H2, W2), dtype=jnp.float32)
    b2 = jax.random.normal(k4, (B2, C2, H2, W2), dtype=jnp.float32)
    ref2 = _reference_jax(b1, b2, n_channels=C2, win_size=win_size)
    out2 = jax.block_until_ready(
        sim_score_ssim(b1, b2, n_channels=C2, win_size=win_size,
                       approx_reciprocal=False))
    np.testing.assert_allclose(np.asarray(out2), np.asarray(ref2),
                               rtol=1e-5, atol=2e-5)

    print("KERNEL_OK")
</pallas_src>

<mosaic_0001>
module attributes {stable_mosaic.version = 11 : i64} {
  func.func @_ssim_kernel(%arg0: i32, %arg1: memref<16x16xf32, #tpu.memory_space<vmem>>, %arg2: memref<128x128xf32, #tpu.memory_space<vmem>>, %arg3: memref<1x16x128xf32, #tpu.memory_space<vmem>>, %arg4: memref<1x16x128xf32, #tpu.memory_space<vmem>>, %arg5: memref<1x16x128xf32, #tpu.memory_space<vmem>>) attributes {dimension_semantics = [#tpu.dimension_semantics<parallel>], iteration_bounds = array<i64: 1>, scalar_prefetch = 0 : i64, scratch_operands = 0 : i64, tpu.core_type = #tpu.core_type<tc>, window_params = [{pipeline_mode = #tpu.pipeline_mode<synchronous>, transform_indices = @transform_0, window_bounds = array<i64: 16, 16>}, {pipeline_mode = #tpu.pipeline_mode<synchronous>, transform_indices = @transform_1, window_bounds = array<i64: 128, 128>}, {transform_indices = @transform_2, window_bounds = array<i64: 1, 16, 128>}, {transform_indices = @transform_3, window_bounds = array<i64: 1, 16, 128>}, {transform_indices = @transform_4, window_bounds = array<i64: 1, 16, 128>}]} {
    %c0 = arith.constant 0 : index
    %c0_0 = arith.constant 0 : index
    %0 = vector.load %arg1[%c0, %c0_0] : memref<16x16xf32, #tpu.memory_space<vmem>>, vector<16x16xf32>
    %c0_1 = arith.constant 0 : index
    %c0_2 = arith.constant 0 : index
    %1 = vector.load %arg2[%c0_1, %c0_2] : memref<128x128xf32, #tpu.memory_space<vmem>>, vector<128x128xf32>
    %c0_3 = arith.constant 0 : index
    %c0_4 = arith.constant 0 : index
    %c0_5 = arith.constant 0 : index
    %2 = vector.load %arg3[%c0_3, %c0_4, %c0_5] : memref<1x16x128xf32, #tpu.memory_space<vmem>>, vector<1x16x128xf32>
    %3 = vector.shape_cast %2 : vector<1x16x128xf32> to vector<16x128xf32>
    %c0_6 = arith.constant 0 : index
    %c0_7 = arith.constant 0 : index
    %c0_8 = arith.constant 0 : index
    %4 = vector.load %arg4[%c0_6, %c0_7, %c0_8] : memref<1x16x128xf32, #tpu.memory_space<vmem>>, vector<1x16x128xf32>
    %5 = vector.shape_cast %4 : vector<1x16x128xf32> to vector<16x128xf32>
    %cst = arith.constant dense<0.000000e+00> : vector<16x128xf32>
    %6 = tpu.matmul %3, %1, %cst {dimension_numbers = #tpu.dot_dimension_numbers<[1], [0], [0], [1], [0, 0, 1, 1], [], []>} : vector<16x128xf32>, vector<128x128xf32>, vector<16x128xf32> -> vector<16x128xf32>
    %cst_9 = arith.constant dense<0.000000e+00> : vector<16x128xf32>
    %7 = tpu.matmul %0, %6, %cst_9 {dimension_numbers = #tpu.dot_dimension_numbers<[1], [0], [0], [1], [0, 0, 1, 1], [], []>} : vector<16x16xf32>, vector<16x128xf32>, vector<16x128xf32> -> vector<16x128xf32>
    %cst_10 = arith.constant dense<0.000000e+00> : vector<16x128xf32>
    %8 = tpu.matmul %5, %1, %cst_10 {dimension_numbers = #tpu.dot_dimension_numbers<[1], [0], [0], [1], [0, 0, 1, 1], [], []>} : vector<16x128xf32>, vector<128x128xf32>, vector<16x128xf32> -> vector<16x128xf32>
    %cst_11 = arith.constant dense<0.000000e+00> : vector<16x128xf32>
    %9 = tpu.matmul %0, %8, %cst_11 {dimension_numbers = #tpu.dot_dimension_numbers<[1], [0], [0], [1], [0, 0, 1, 1], [], []>} : vector<16x16xf32>, vector<16x128xf32>, vector<16x128xf32> -> vector<16x128xf32>
    %10 = arith.mulf %3, %3 : vector<16x128xf32>
    %cst_12 = arith.constant dense<0.000000e+00> : vector<16x128xf32>
    %11 = tpu.matmul %10, %1, %cst_12 {dimension_numbers = #tpu.dot_dimension_numbers<[1], [0], [0], [1], [0, 0, 1, 1], [], []>} : vector<16x128xf32>, vector<128x128xf32>, vector<16x128xf32> -> vector<16x128xf32>
    %cst_13 = arith.constant dense<0.000000e+00> : vector<16x128xf32>
    %12 = tpu.matmul %0, %11, %cst_13 {dimension_numbers = #tpu.dot_dimension_numbers<[1], [0], [0], [1], [0, 0, 1, 1], [], []>} : vector<16x16xf32>, vector<16x128xf32>, vector<16x128xf32> -> vector<16x128xf32>
    %13 = arith.mulf %5, %5 : vector<16x128xf32>
    %cst_14 = arith.constant dense<0.000000e+00> : vector<16x128xf32>
    %14 = tpu.matmul %13, %1, %cst_14 {dimension_numbers = #tpu.dot_dimension_numbers<[1], [0], [0], [1], [0, 0, 1, 1], [], []>} : vector<16x128xf32>, vector<128x128xf32>, vector<16x128xf32> -> vector<16x128xf32>
    %cst_15 = arith.constant dense<0.000000e+00> : vector<16x128xf32>
    %15 = tpu.matmul %0, %14, %cst_15 {dimension_numbers = #tpu.dot_dimension_numbers<[1], [0], [0], [1], [0, 0, 1, 1], [], []>} : vector<16x16xf32>, vector<16x128xf32>, vector<16x128xf32> -> vector<16x128xf32>
    %16 = arith.mulf %3, %5 : vector<16x128xf32>
    %cst_16 = arith.constant dense<0.000000e+00> : vector<16x128xf32>
    %17 = tpu.matmul %16, %1, %cst_16 {dimension_numbers = #tpu.dot_dimension_numbers<[1], [0], [0], [1], [0, 0, 1, 1], [], []>} : vector<16x128xf32>, vector<128x128xf32>, vector<16x128xf32> -> vector<16x128xf32>
    %cst_17 = arith.constant dense<0.000000e+00> : vector<16x128xf32>
    %18 = tpu.matmul %0, %17, %cst_17 {dimension_numbers = #tpu.dot_dimension_numbers<[1], [0], [0], [1], [0, 0, 1, 1], [], []>} : vector<16x16xf32>, vector<16x128xf32>, vector<16x128xf32> -> vector<16x128xf32>
    %19 = arith.mulf %7, %7 : vector<16x128xf32>
    %20 = arith.mulf %9, %9 : vector<16x128xf32>
    %21 = arith.mulf %7, %9 : vector<16x128xf32>
    %22 = arith.subf %12, %19 : vector<16x128xf32>
    %23 = math.absf %22 : vector<16x128xf32>
    %24 = arith.subf %15, %20 : vector<16x128xf32>
    %25 = math.absf %24 : vector<16x128xf32>
    %26 = arith.subf %18, %21 : vector<16x128xf32>
    %cst_18 = arith.constant 2.000000e+00 : f32
    %27 = vector.broadcast %cst_18 : f32 to vector<16x128xf32>
    %28 = arith.mulf %27, %21 : vector<16x128xf32>
    %cst_19 = arith.constant 9.99999974E-5 : f32
    %29 = vector.broadcast %cst_19 : f32 to vector<16x128xf32>
    %30 = arith.addf %28, %29 : vector<16x128xf32>
    %cst_20 = arith.constant 2.000000e+00 : f32
    %31 = vector.broadcast %cst_20 : f32 to vector<16x128xf32>
    %32 = arith.mulf %31, %26 : vector<16x128xf32>
    %cst_21 = arith.constant 8.99999984E-4 : f32
    %33 = vector.broadcast %cst_21 : f32 to vector<16x128xf32>
    %34 = arith.addf %32, %33 : vector<16x128xf32>
    %35 = arith.mulf %30, %34 : vector<16x128xf32>
    %36 = arith.addf %19, %20 : vector<16x128xf32>
    %cst_22 = arith.constant 9.99999974E-5 : f32
    %37 = vector.broadcast %cst_22 : f32 to vector<16x128xf32>
    %38 = arith.addf %36, %37 : vector<16x128xf32>
    %39 = arith.addf %23, %25 : vector<16x128xf32>
    %cst_23 = arith.constant 8.99999984E-4 : f32
    %40 = vector.broadcast %cst_23 : f32 to vector<16x128xf32>
    %41 = arith.addf %39, %40 : vector<16x128xf32>
    %42 = arith.mulf %38, %41 : vector<16x128xf32>
    %43 = tpu.reciprocal %42 : vector<16x128xf32> -> vector<16x128xf32>
    %44 = arith.mulf %35, %43 : vector<16x128xf32>
    %cst_24 = arith.constant -1.000000e+00 : f32
    %cst_25 = arith.constant 1.000000e+00 : f32
    %45 = vector.broadcast %cst_24 : f32 to vector<16x128xf32>
    %46 = arith.maximumf %45, %44 : vector<16x128xf32>
    %47 = vector.broadcast %cst_25 : f32 to vector<16x128xf32>
    %48 = arith.minimumf %47, %46 : vector<16x128xf32>
    %cst_26 = arith.constant 1.000000e+00 : f32
    %49 = vector.broadcast %cst_26 : f32 to vector<16x128xf32>
    %50 = arith.addf %48, %49 : vector<16x128xf32>
    %cst_27 = arith.constant 5.000000e-01 : f32
    %51 = vector.broadcast %cst_27 : f32 to vector<16x128xf32>
    %52 = arith.mulf %50, %51 : vector<16x128xf32>
    %cst_28 = arith.constant 1.000000e+00 : f32
    %53 = vector.broadcast %cst_28 : f32 to vector<16x128xf32>
    %54 = arith.subf %53, %52 : vector<16x128xf32>
    %c0_29 = arith.constant 0 : index
    %c0_30 = arith.constant 0 : index
    %c0_31 = arith.constant 0 : index
    %55 = vector.load %arg5[%c0_29, %c0_30, %c0_31] : memref<1x16x128xf32, #tpu.memory_space<vmem>>, vector<1x16x128xf32>
    %56 = vector.shape_cast %55 : vector<1x16x128xf32> to vector<16x128xf32>
    %57 = vector.shape_cast %54 : vector<16x128xf32> to vector<1x16x128xf32>
    tpu.vector_store %arg5[%c0_29, %c0_30, %c0_31], %57 {strides = array<i32>} : memref<1x16x128xf32, #tpu.memory_space<vmem>>, vector<1x16x128xf32>,
    return
  }
  func.func @transform_0(%arg0: i32) -> (i32, i32) {
    %c0_i32 = arith.constant 0 : i32
    %c0_i32_0 = arith.constant 0 : i32
    %c0_i32_1 = arith.constant 0 : i32
    return %c0_i32, %c0_i32_0 : i32, i32
  }
  func.func @transform_1(%arg0: i32) -> (i32, i32) {
    %c0_i32 = arith.constant 0 : i32
    %c0_i32_0 = arith.constant 0 : i32
    %c0_i32_1 = arith.constant 0 : i32
    return %c0_i32, %c0_i32_0 : i32, i32
  }
  func.func @transform_2(%arg0: i32) -> (i32, i32, i32) {
    %c0_i32 = arith.constant 0 : i32
    %c0_i32_0 = arith.constant 0 : i32
    %c0_i32_1 = arith.constant 0 : i32
    return %arg0, %c0_i32, %c0_i32_0 : i32, i32, i32
  }
  func.func @transform_3(%arg0: i32) -> (i32, i32, i32) {
    %c0_i32 = arith.constant 0 : i32
    %c0_i32_0 = arith.constant 0 : i32
    %c0_i32_1 = arith.constant 0 : i32
    return %arg0, %c0_i32, %c0_i32_0 : i32, i32, i32
  }
  func.func @transform_4(%arg0: i32) -> (i32, i32, i32) {
    %c0_i32 = arith.constant 0 : i32
    %c0_i32_0 = arith.constant 0 : i32
    %c0_i32_1 = arith.constant 0 : i32
    return %arg0, %c0_i32, %c0_i32_0 : i32, i32, i32
  }
}

module attributes {stable_mosaic.version = 11 : i64} {
  func.func @_ssim_kernel(%arg0: i32, %arg1: memref<16x16xf32, #tpu.memory_space<vmem>>, %arg2: memref<128x128xf32, #tpu.memory_space<vmem>>, %arg3: memref<1x16x128xf32, #tpu.memory_space<vmem>>, %arg4: memref<1x16x128xf32, #tpu.memory_space<vmem>>, %arg5: memref<1x16x128xf32, #tpu.memory_space<vmem>>) attributes {dimension_semantics = [#tpu.dimension_semantics<parallel>], iteration_bounds = array<i64: 1>, scalar_prefetch = 0 : i64, scratch_operands = 0 : i64, tpu.core_type = #tpu.core_type<tc>, window_params = [{pipeline_mode = #tpu.pipeline_mode<synchronous>, transform_indices = @transform_0, window_bounds = array<i64: 16, 16>}, {pipeline_mode = #tpu.pipeline_mode<synchronous>, transform_indices = @transform_1, window_bounds = array<i64: 128, 128>}, {transform_indices = @transform_2, window_bounds = array<i64: 1, 16, 128>}, {transform_indices = @transform_3, window_bounds = array<i64: 1, 16, 128>}, {transform_indices = @transform_4, window_bounds = array<i64: 1, 16, 128>}]} {
    %c0 = arith.constant 0 : index
    %c0_0 = arith.constant 0 : index
    %0 = vector.load %arg1[%c0, %c0_0] : memref<16x16xf32, #tpu.memory_space<vmem>>, vector<16x16xf32>
    %c0_1 = arith.constant 0 : index
    %c0_2 = arith.constant 0 : index
    %1 = vector.load %arg2[%c0_1, %c0_2] : memref<128x128xf32, #tpu.memory_space<vmem>>, vector<128x128xf32>
    %c0_3 = arith.constant 0 : index
    %c0_4 = arith.constant 0 : index
    %c0_5 = arith.constant 0 : index
    %2 = vector.load %arg3[%c0_3, %c0_4, %c0_5] : memref<1x16x128xf32, #tpu.memory_space<vmem>>, vector<1x16x128xf32>
    %3 = vector.shape_cast %2 : vector<1x16x128xf32> to vector<16x128xf32>
    %c0_6 = arith.constant 0 : index
    %c0_7 = arith.constant 0 : index
    %c0_8 = arith.constant 0 : index
    %4 = vector.load %arg4[%c0_6, %c0_7, %c0_8] : memref<1x16x128xf32, #tpu.memory_space<vmem>>, vector<1x16x128xf32>
    %5 = vector.shape_cast %4 : vector<1x16x128xf32> to vector<16x128xf32>
    %cst = arith.constant dense<0.000000e+00> : vector<16x128xf32>
    %6 = tpu.matmul %3, %1, %cst {dimension_numbers = #tpu.dot_dimension_numbers<[1], [0], [0], [1], [0, 0, 1, 1], [], []>} : vector<16x128xf32>, vector<128x128xf32>, vector<16x128xf32> -> vector<16x128xf32>
    %cst_9 = arith.constant dense<0.000000e+00> : vector<16x128xf32>
    %7 = tpu.matmul %0, %6, %cst_9 {dimension_numbers = #tpu.dot_dimension_numbers<[1], [0], [0], [1], [0, 0, 1, 1], [], []>} : vector<16x16xf32>, vector<16x128xf32>, vector<16x128xf32> -> vector<16x128xf32>
    %cst_10 = arith.constant dense<0.000000e+00> : vector<16x128xf32>
    %8 = tpu.matmul %5, %1, %cst_10 {dimension_numbers = #tpu.dot_dimension_numbers<[1], [0], [0], [1], [0, 0, 1, 1], [], []>} : vector<16x128xf32>, vector<128x128xf32>, vector<16x128xf32> -> vector<16x128xf32>
    %cst_11 = arith.constant dense<0.000000e+00> : vector<16x128xf32>
    %9 = tpu.matmul %0, %8, %cst_11 {dimension_numbers = #tpu.dot_dimension_numbers<[1], [0], [0], [1], [0, 0, 1, 1], [], []>} : vector<16x16xf32>, vector<16x128xf32>, vector<16x128xf32> -> vector<16x128xf32>
    %10 = arith.mulf %3, %3 : vector<16x128xf32>
    %cst_12 = arith.constant dense<0.000000e+00> : vector<16x128xf32>
    %11 = tpu.matmul %10, %1, %cst_12 {dimension_numbers = #tpu.dot_dimension_numbers<[1], [0], [0], [1], [0, 0, 1, 1], [], []>} : vector<16x128xf32>, vector<128x128xf32>, vector<16x128xf32> -> vector<16x128xf32>
    %cst_13 = arith.constant dense<0.000000e+00> : vector<16x128xf32>
    %12 = tpu.matmul %0, %11, %cst_13 {dimension_numbers = #tpu.dot_dimension_numbers<[1], [0], [0], [1], [0, 0, 1, 1], [], []>} : vector<16x16xf32>, vector<16x128xf32>, vector<16x128xf32> -> vector<16x128xf32>
    %13 = arith.mulf %5, %5 : vector<16x128xf32>
    %cst_14 = arith.constant dense<0.000000e+00> : vector<16x128xf32>
    %14 = tpu.matmul %13, %1, %cst_14 {dimension_numbers = #tpu.dot_dimension_numbers<[1], [0], [0], [1], [0, 0, 1, 1], [], []>} : vector<16x128xf32>, vector<128x128xf32>, vector<16x128xf32> -> vector<16x128xf32>
    %cst_15 = arith.constant dense<0.000000e+00> : vector<16x128xf32>
    %15 = tpu.matmul %0, %14, %cst_15 {dimension_numbers = #tpu.dot_dimension_numbers<[1], [0], [0], [1], [0, 0, 1, 1], [], []>} : vector<16x16xf32>, vector<16x128xf32>, vector<16x128xf32> -> vector<16x128xf32>
    %16 = arith.mulf %3, %5 : vector<16x128xf32>
    %cst_16 = arith.constant dense<0.000000e+00> : vector<16x128xf32>
    %17 = tpu.matmul %16, %1, %cst_16 {dimension_numbers = #tpu.dot_dimension_numbers<[1], [0], [0], [1], [0, 0, 1, 1], [], []>} : vector<16x128xf32>, vector<128x128xf32>, vector<16x128xf32> -> vector<16x128xf32>
    %cst_17 = arith.constant dense<0.000000e+00> : vector<16x128xf32>
    %18 = tpu.matmul %0, %17, %cst_17 {dimension_numbers = #tpu.dot_dimension_numbers<[1], [0], [0], [1], [0, 0, 1, 1], [], []>} : vector<16x16xf32>, vector<16x128xf32>, vector<16x128xf32> -> vector<16x128xf32>
    %19 = arith.mulf %7, %7 : vector<16x128xf32>
    %20 = arith.mulf %9, %9 : vector<16x128xf32>
    %21 = arith.mulf %7, %9 : vector<16x128xf32>
    %22 = arith.subf %12, %19 : vector<16x128xf32>
    %23 = math.absf %22 : vector<16x128xf32>
    %24 = arith.subf %15, %20 : vector<16x128xf32>
    %25 = math.absf %24 : vector<16x128xf32>
    %26 = arith.subf %18, %21 : vector<16x128xf32>
    %cst_18 = arith.constant 2.000000e+00 : f32
    %27 = vector.broadcast %cst_18 : f32 to vector<16x128xf32>
    %28 = arith.mulf %27, %21 : vector<16x128xf32>
    %cst_19 = arith.constant 9.99999974E-5 : f32
    %29 = vector.broadcast %cst_19 : f32 to vector<16x128xf32>
    %30 = arith.addf %28, %29 : vector<16x128xf32>
    %cst_20 = arith.constant 2.000000e+00 : f32
    %31 = vector.broadcast %cst_20 : f32 to vector<16x128xf32>
    %32 = arith.mulf %31, %26 : vector<16x128xf32>
    %cst_21 = arith.constant 8.99999984E-4 : f32
    %33 = vector.broadcast %cst_21 : f32 to vector<16x128xf32>
    %34 = arith.addf %32, %33 : vector<16x128xf32>
    %35 = arith.mulf %30, %34 : vector<16x128xf32>
    %36 = arith.addf %19, %20 : vector<16x128xf32>
    %cst_22 = arith.constant 9.99999974E-5 : f32
    %37 = vector.broadcast %cst_22 : f32 to vector<16x128xf32>
    %38 = arith.addf %36, %37 : vector<16x128xf32>
    %39 = arith.addf %23, %25 : vector<16x128xf32>
    %cst_23 = arith.constant 8.99999984E-4 : f32
    %40 = vector.broadcast %cst_23 : f32 to vector<16x128xf32>
    %41 = arith.addf %39, %40 : vector<16x128xf32>
    %42 = arith.mulf %38, %41 : vector<16x128xf32>
    %43 = tpu.reciprocal %42 : vector<16x128xf32> -> vector<16x128xf32>
    %44 = arith.mulf %35, %43 : vector<16x128xf32>
    %cst_24 = arith.constant -1.000000e+00 : f32
    %cst_25 = arith.constant 1.000000e+00 : f32
    %45 = vector.broadcast %cst_24 : f32 to vector<16x128xf32>
    %46 = arith.maximumf %45, %44 : vector<16x128xf32>
    %47 = vector.broadcast %cst_25 : f32 to vector<16x128xf32>
    %48 = arith.minimumf %47, %46 : vector<16x128xf32>
    %cst_26 = arith.constant 1.000000e+00 : f32
    %49 = vector.broadcast %cst_26 : f32 to vector<16x128xf32>
    %50 = arith.addf %48, %49 : vector<16x128xf32>
    %cst_27 = arith.constant 5.000000e-01 : f32
    %51 = vector.broadcast %cst_27 : f32 to vector<16x128xf32>
    %52 = arith.mulf %50, %51 : vector<16x128xf32>
    %cst_28 = arith.constant 1.000000e+00 : f32
    %53 = vector.broadcast %cst_28 : f32 to vector<16x128xf32>
    %54 = arith.subf %53, %52 : vector<16x128xf32>
    %c0_29 = arith.constant 0 : index
    %c0_30 = arith.constant 0 : index
    %c0_31 = arith.constant 0 : index
    %55 = vector.load %arg5[%c0_29, %c0_30, %c0_31] : memref<1x16x128xf32, #tpu.memory_space<vmem>>, vector<1x16x128xf32>
    %56 = vector.shape_cast %55 : vector<1x16x128xf32> to vector<16x128xf32>
    %57 = vector.shape_cast %54 : vector<16x128xf32> to vector<1x16x128xf32>
    tpu.vector_store %arg5[%c0_29, %c0_30, %c0_31], %57 {strides = array<i32>} : memref<1x16x128xf32, #tpu.memory_space<vmem>>, vector<1x16x128xf32>,
    return
  }
  func.func @transform_0(%arg0: i32) -> (i32, i32) {
    %c0_i32 = arith.constant 0 : i32
    %c0_i32_0 = arith.constant 0 : i32
    %c0_i32_1 = arith.constant 0 : i32
    return %c0_i32, %c0_i32_0 : i32, i32
  }
  func.func @transform_1(%arg0: i32) -> (i32, i32) {
    %c0_i32 = arith.constant 0 : i32
    %c0_i32_0 = arith.constant 0 : i32
    %c0_i32_1 = arith.constant 0 : i32
    return %c0_i32, %c0_i32_0 : i32, i32
  }
  func.func @transform_2(%arg0: i32) -> (i32, i32, i32) {
    %c0_i32 = arith.constant 0 : i32
    %c0_i32_0 = arith.constant 0 : i32
    %c0_i32_1 = arith.constant 0 : i32
    return %arg0, %c0_i32, %c0_i32_0 : i32, i32, i32
  }
  func.func @transform_3(%arg0: i32) -> (i32, i32, i32) {
    %c0_i32 = arith.constant 0 : i32
    %c0_i32_0 = arith.constant 0 : i32
    %c0_i32_1 = arith.constant 0 : i32
    return %arg0, %c0_i32, %c0_i32_0 : i32, i32, i32
  }
  func.func @transform_4(%arg0: i32) -> (i32, i32, i32) {
    %c0_i32 = arith.constant 0 : i32
    %c0_i32_0 = arith.constant 0 : i32
    %c0_i32_1 = arith.constant 0 : i32
    return %arg0, %c0_i32, %c0_i32_0 : i32, i32, i32
  }
}

</mosaic_0001>

<llo_original>
// kernel: tpu_custom_call.1
$region0: #{tpu_custom_call.1}
  #allocation0 [shape = 'u32[]', space=smem, size = 0x4, offset = 0x4, fixed_abs, tag = 'smem constant byte address 0x4 - core index']
  #allocation1 [shape = 'u32[144,128]{1,0:T(1,128)}', space=vmem, size = 0x12000, scoped, tag = 'internal scratch']
  %s0 = inlined_call_operand.hbm [shape: f32[16,16], index: 0, kind: input, shape index: {}]
  %s1 = inlined_call_operand.hbm [shape: f32[128,128], index: 1, kind: input, shape index: {}]
  %s2 = inlined_call_operand.hbm [shape: f32[1,16,128], index: 2, kind: input, shape index: {}]
  %s3 = inlined_call_operand.hbm [shape: f32[1,16,128], index: 3, kind: input, shape index: {}]
  %s4 = inlined_call_operand.hbm [shape: f32[1,16,128], index: 4, kind: output, shape index: {}]
  %s5 = sld [smem:[#allocation0]]
  $region42: #{tpu_custom_call.1} parent=0
    _
  %s7 = ssub.s32 1, %s5
  %s8 = scalar_select 0, %s7, %s5
  $region1: #{tpu_custom_call.1} parent=0
    #allocation2 [shape = 'u8[8192]{0}', space=vmem, size = 0x2000, scoped, tag = 'input window, operand 0, single buffered']
    #allocation3 [shape = 's32[1]{0}', space=sflag, size = 0x4, scoped, tag = 'scoped memory for tpu_custom_call.1']
    #allocation4 [shape = 's32[1]{0}', space=sflag, size = 0x4, scoped, tag = 'scoped memory for tpu_custom_call.1']
    #allocation5 [shape = 'u8[65536]{0}', space=vmem, size = 0x10000, scoped, tag = 'input window, operand 1, single buffered']
    #allocation6 [shape = 's32[1]{0}', space=sflag, size = 0x4, scoped, tag = 'scoped memory for tpu_custom_call.1']
    #allocation7 [shape = 'u8[8192]{0}', space=vmem, size = 0x2000, scoped, tag = 'input window, operand 2, single buffered']
    #allocation8 [shape = 'u8[8192]{0}', space=vmem, size = 0x2000, scoped, tag = 'input window, operand 3, single buffered']
    #allocation9 [shape = 's32[1]{0}', space=sflag, size = 0x4, scoped, tag = 'scoped memory for tpu_custom_call.1']
    #allocation10 [shape = 'u8[8192]{0}', space=vmem, size = 0x2000, scoped, tag = 'output window, operand 0, single buffered']
    %9 = vsyncpa [#allocation3], 0
    %10 = vsyncpa [#allocation6], 0
    %11 = vsyncpa [#allocation9], 0
    %12 = vsyncpa [#allocation4], 0
    // Predicated region
    $region2: #{tpu_custom_call.1} parent=1 // pred_check
      _
    $region3: #{tpu_custom_call.1} parent=1 // pred_check_branch
      %14 = sbr.rel (0) target = $region5
    $region4: #{tpu_custom_call.1} parent=1 // pred_region
      %s16 = ssub.s32 256, 256
      %17 = vsyncadd [#allocation3], %s16
      %s18 = sshll.u32 [#allocation2], 4
      %s19 = int_to_ptr.vmem [resolvable:$true] %s18
      %24 = dma.hbm_to_vmem [thread:$0]  %s0, 256, %s19, [#allocation3], 128, 128, 8
    $region5: #{tpu_custom_call.1} parent=1 // pred_fallthru
      _
    // Predicated region
    $region6: #{tpu_custom_call.1} parent=1 // pred_check
      _
    $region7: #{tpu_custom_call.1} parent=1 // pred_check_branch
      %26 = sbr.rel (0) target = $region9
    $region8: #{tpu_custom_call.1} parent=1 // pred_region
      %s28 = ssub.s32 2048, 2048
      %29 = vsyncadd [#allocation6], %s28
      %s30 = sshll.u32 [#allocation5], 4
      %s31 = int_to_ptr.vmem [resolvable:$true] %s30
      %36 = dma.hbm_to_vmem [thread:$0]  %s1, 2048, %s31, [#allocation6], 128, 128, 8
    $region9: #{tpu_custom_call.1} parent=1 // pred_fallthru
      _
    // Predicated region
    $region10: #{tpu_custom_call.1} parent=1 // pred_check
      _
    $region11: #{tpu_custom_call.1} parent=1 // pred_check_branch
      %38 = sbr.rel (0) target = $region13
    $region12: #{tpu_custom_call.1} parent=1 // pred_region
      %s40 = ssub.s32 256, 256
      %41 = vsyncadd [#allocation6], %s40
      %s42 = sshll.u32 [#allocation7], 4
      %s43 = int_to_ptr.vmem [resolvable:$true] %s42
      %48 = dma.hbm_to_vmem [thread:$0]  %s2, 256, %s43, [#allocation6], 128, 128, 8
    $region13: #{tpu_custom_call.1} parent=1 // pred_fallthru
      _
    // Predicated region
    $region14: #{tpu_custom_call.1} parent=1 // pred_check
      _
    $region15: #{tpu_custom_call.1} parent=1 // pred_check_branch
      %50 = sbr.rel (0) target = $region17
    $region16: #{tpu_custom_call.1} parent=1 // pred_region
      %s52 = ssub.s32 256, 256
      %53 = vsyncadd [#allocation9], %s52
      %s54 = sshll.u32 [#allocation8], 4
      %s55 = int_to_ptr.vmem [resolvable:$true] %s54
      %60 = dma.hbm_to_vmem [thread:$0]  %s3, 256, %s55, [#allocation9], 128, 128, 8
    $region17: #{tpu_custom_call.1} parent=1 // pred_fallthru
      _
    // Predicated region
    $region18: #{tpu_custom_call.1} parent=1 // pred_check
      _
    $region19: #{tpu_custom_call.1} parent=1 // pred_check_branch
      %62 = sbr.rel (0) target = $region21
    $region20: #{tpu_custom_call.1} parent=1 // pred_region
      %63 = dma.done [#allocation3], 256
    $region21: #{tpu_custom_call.1} parent=1 // pred_fallthru
      _
    // Predicated region
    $region22: #{tpu_custom_call.1} parent=1 // pred_check
      _
    $region23: #{tpu_custom_call.1} parent=1 // pred_check_branch
      %65 = sbr.rel (0) target = $region25
    $region24: #{tpu_custom_call.1} parent=1 // pred_region
      %66 = dma.done [#allocation6], 2048
    $region25: #{tpu_custom_call.1} parent=1 // pred_fallthru
      _
    // Predicated region
    $region26: #{tpu_custom_call.1} parent=1 // pred_check
      _
    $region27: #{tpu_custom_call.1} parent=1 // pred_check_branch
      %68 = sbr.rel (0) target = $region29
    $region28: #{tpu_custom_call.1} parent=1 // pred_region
      %69 = dma.done [#allocation6], 256
    $region29: #{tpu_custom_call.1} parent=1 // pred_fallthru
      _
    // Predicated region
    $region30: #{tpu_custom_call.1} parent=1 // pred_check
      _
    $region31: #{tpu_custom_call.1} parent=1 // pred_check_branch
      %71 = sbr.rel (0) target = $region33
    $region32: #{tpu_custom_call.1} parent=1 // pred_region
      %72 = dma.done [#allocation9], 256
    $region33: #{tpu_custom_call.1} parent=1 // pred_fallthru
      _
    %v73 = vld [vmem:[#allocation2] sm:$0xff]
    %v74 = vld [vmem:[#allocation2 + $0x8] sm:$0xff]
    %v75 = vld [vmem:[#allocation5] sm:$0xff]
    %v76 = vld [vmem:[#allocation5 + $0x8] sm:$0xff]
    %v77 = vld [vmem:[#allocation5 + $0x10] sm:$0xff]
    %v78 = vld [vmem:[#allocation5 + $0x18] sm:$0xff]
    %v79 = vld [vmem:[#allocation5 + $0x20] sm:$0xff]
    %v80 = vld [vmem:[#allocation5 + $0x28] sm:$0xff]
    %v81 = vld [vmem:[#allocation5 + $0x30] sm:$0xff]
    %v82 = vld [vmem:[#allocation5 + $0x38] sm:$0xff]
    %v83 = vld [vmem:[#allocation5 + $0x40] sm:$0xff]
    %v84 = vld [vmem:[#allocation5 + $0x48] sm:$0xff]
    %v85 = vld [vmem:[#allocation5 + $0x50] sm:$0xff]
    %v86 = vld [vmem:[#allocation5 + $0x58] sm:$0xff]
    %v87 = vld [vmem:[#allocation5 + $0x60] sm:$0xff]
    %v88 = vld [vmem:[#allocation5 + $0x68] sm:$0xff]
    %v89 = vld [vmem:[#allocation5 + $0x70] sm:$0xff]
    %v90 = vld [vmem:[#allocation5 + $0x78] sm:$0xff]
    %v91 = vld [vmem:[#allocation7] sm:$0xff]
    %v92 = vld [vmem:[#allocation7 + $0x8] sm:$0xff]
    %v93 = vld [vmem:[#allocation8] sm:$0xff]
    %v94 = vld [vmem:[#allocation8 + $0x8] sm:$0xff]
    %95 = vmatprep.subr.mxu0 0.0
    %96 = vmatpush1.msra.mxu0 %v75
    %97 = vmatprep.subr.mxu0 0.0
    %98 = vmatpush1.msra.mxu0 %v76
    %99 = vmatprep.subr.mxu0 0.0
    %100 = vmatpush1.msra.mxu0 %v77
    %101 = vmatprep.subr.mxu0 0.0
    %102 = vmatpush1.msra.mxu0 %v78
    %103 = vmatprep.subr.mxu0 0.0
    %104 = vmatpush1.msra.mxu0 %v79
    %105 = vmatprep.subr.mxu0 0.0
    %106 = vmatpush1.msra.mxu0 %v80
    %107 = vmatprep.subr.mxu0 0.0
    %108 = vmatpush1.msra.mxu0 %v81
    %109 = vmatprep.subr.mxu0 0.0
    %110 = vmatpush1.msra.mxu0 %v82
    %111 = vmatprep.subr.mxu0 0.0
    %112 = vmatpush1.msra.mxu0 %v83
    %113 = vmatprep.subr.mxu0 0.0
    %114 = vmatpush1.msra.mxu0 %v84
    %115 = vmatprep.subr.mxu0 0.0
    %116 = vmatpush1.msra.mxu0 %v85
    %117 = vmatprep.subr.mxu0 0.0
    %118 = vmatpush1.msra.mxu0 %v86
    %119 = vmatprep.subr.mxu0 0.0
    %120 = vmatpush1.msra.mxu0 %v87
    %121 = vmatprep.subr.mxu0 0.0
    %122 = vmatpush1.msra.mxu0 %v88
    %123 = vmatprep.subr.mxu0 0.0
    %124 = vmatpush1.msra.mxu0 %v89
    %125 = vmatprep.subr.mxu0 0.0
    %126 = vmatpush1.msra.mxu0 %v90
    %127 = vmatprep.subr.mxu0 0.0
    %128 = vmatpush1.msra.mxu0 0.0
    %129 = vmatprep.subr.mxu0 0.0
    %130 = vmatpush1.msra.mxu0 0.0
    %131 = vmatprep.subr.mxu0 0.0
    %132 = vmatpush1.msra.mxu0 0.0
    %133 = vmatprep.subr.mxu0 0.0
    %134 = vmatpush1.msra.mxu0 0.0
    %135 = vmatprep.subr.mxu0 0.0
    %136 = vmatpush1.msra.mxu0 0.0
    %137 = vmatprep.subr.mxu0 0.0
    %138 = vmatpush1.msra.mxu0 0.0
    %139 = vmatprep.subr.mxu0 0.0
    %140 = vmatpush1.msra.mxu0 0.0
    %141 = vmatprep.subr.mxu0 0.0
    %142 = vmatpush1.msra.mxu0 0.0
    %143 = vmatprep.subr.mxu0 0.0
    %144 = vmatpush1.msra.mxu0 0.0
    %145 = vmatprep.subr.mxu0 0.0
    %146 = vmatpush1.msra.mxu0 0.0
    %147 = vmatprep.subr.mxu0 0.0
    %148 = vmatpush1.msra.mxu0 0.0
    %149 = vmatprep.subr.mxu0 0.0
    %150 = vmatpush1.msra.mxu0 0.0
    %151 = vmatprep.subr.mxu0 0.0
    %152 = vmatpush1.msra.mxu0 0.0
    %153 = vmatprep.subr.mxu0 0.0
    %154 = vmatpush1.msra.mxu0 0.0
    %155 = vmatprep.subr.mxu0 0.0
    %156 = vmatpush1.msra.mxu0 0.0
    %157 = vmatprep.subr.mxu0 0.0
    %158 = vmatpush1.msra.mxu0 0.0
    %159 = vmatprep.mubr.f32.mxu0 0.0
    %160 = vmatmul.mubr.f32.gmra.mrb[0].mxu0 %v91
    %v161 = vpop.f32.mrb[0].mxu0
    %v162 = vadd.f32 0.0, %v161
    %v163 = vpop.f32.mrb[0].mxu0
    %164 = vmatprep.mubr.f32.mxu0 0.0
    %165 = vmatmul.mubr.f32.gmra.mrb[0].mxu0 %v92
    %v166 = vpop.f32.mrb[0].mxu0
    %v167 = vadd.f32 0.0, %v166
    %v168 = vpop.f32.mrb[0].mxu0
    %169 = vdwg.mxu0
    %vm170 = vcmask 130048
    %v172 = vsel %vm170, %v73, 0
    %v175 = vsel %vm170, %v74, 0
    %177 = vmatprep.subr.mxu0 0.0
    %178 = vmatpush1.msra.mxu0 %v162
    %179 = vmatprep.subr.mxu0 0.0
    %180 = vmatpush1.msra.mxu0 %v167
    %181 = vmatprep.subr.mxu0 0.0
    %182 = vmatpush1.msra.mxu0 0.0
    %183 = vmatprep.subr.mxu0 0.0
    %184 = vmatpush1.msra.mxu0 0.0
    %185 = vmatprep.subr.mxu0 0.0
    %186 = vmatpush1.msra.mxu0 0.0
    %187 = vmatprep.subr.mxu0 0.0
    %188 = vmatpush1.msra.mxu0 0.0
    %189 = vmatprep.subr.mxu0 0.0
    %190 = vmatpush1.msra.mxu0 0.0
    %191 = vmatprep.subr.mxu0 0.0
    %192 = vmatpush1.msra.mxu0 0.0
    %193 = vmatprep.subr.mxu0 0.0
    %194 = vmatpush1.msra.mxu0 0.0
    %195 = vmatprep.subr.mxu0 0.0
    %196 = vmatpush1.msra.mxu0 0.0
    %197 = vmatprep.subr.mxu0 0.0
    %198 = vmatpush1.msra.mxu0 0.0
    %199 = vmatprep.subr.mxu0 0.0
    %200 = vmatpush1.msra.mxu0 0.0
    %201 = vmatprep.subr.mxu0 0.0
    %202 = vmatpush1.msra.mxu0 0.0
    %203 = vmatprep.subr.mxu0 0.0
    %204 = vmatpush1.msra.mxu0 0.0
    %205 = vmatprep.subr.mxu0 0.0
    %206 = vmatpush1.msra.mxu0 0.0
    %207 = vmatprep.subr.mxu0 0.0
    %208 = vmatpush1.msra.mxu0 0.0
    %209 = vmatprep.subr.mxu0 0.0
    %210 = vmatpush1.msra.mxu0 0.0
    %211 = vmatprep.subr.mxu0 0.0
    %212 = vmatpush1.msra.mxu0 0.0
    %213 = vmatprep.subr.mxu0 0.0
    %214 = vmatpush1.msra.mxu0 0.0
    %215 = vmatprep.subr.mxu0 0.0
    %216 = vmatpush1.msra.mxu0 0.0
    %217 = vmatprep.subr.mxu0 0.0
    %218 = vmatpush1.msra.mxu0 0.0
    %219 = vmatprep.subr.mxu0 0.0
    %220 = vmatpush1.msra.mxu0 0.0
    %221 = vmatprep.subr.mxu0 0.0
    %222 = vmatpush1.msra.mxu0 0.0
    %223 = vmatprep.subr.mxu0 0.0
    %224 = vmatpush1.msra.mxu0 0.0
    %225 = vmatprep.subr.mxu0 0.0
    %226 = vmatpush1.msra.mxu0 0.0
    %227 = vmatprep.subr.mxu0 0.0
    %228 = vmatpush1.msra.mxu0 0.0
    %229 = vmatprep.subr.mxu0 0.0
    %230 = vmatpush1.msra.mxu0 0.0
    %231 = vmatprep.subr.mxu0 0.0
    %232 = vmatpush1.msra.mxu0 0.0
    %233 = vmatprep.subr.mxu0 0.0
    %234 = vmatpush1.msra.mxu0 0.0
    %235 = vmatprep.subr.mxu0 0.0
    %236 = vmatpush1.msra.mxu0 0.0
    %237 = vmatprep.subr.mxu0 0.0
    %238 = vmatpush1.msra.mxu0 0.0
    %239 = vmatprep.subr.mxu0 0.0
    %240 = vmatpush1.msra.mxu0 0.0
    %241 = vmatprep.mubr.f32.mxu0 0.0
    %242 = vmatmul.mubr.f32.gmra.mrb[0].mxu0 %v172
    %v243 = vpop.f32.mrb[0].mxu0
    %v244 = vadd.f32 0.0, %v243
    %v245 = vpop.f32.mrb[0].mxu0
    %246 = vmatprep.mubr.f32.mxu0 0.0
    %247 = vmatmul.mubr.f32.gmra.mrb[0].mxu0 %v175
    %v248 = vpop.f32.mrb[0].mxu0
    %v249 = vadd.f32 0.0, %v248
    %v250 = vpop.f32.mrb[0].mxu0
    %251 = vdwg.mxu0
    %252 = vmatprep.subr.mxu0 0.0
    %253 = vmatpush1.msra.mxu0 %v75
    %254 = vmatprep.subr.mxu0 0.0
    %255 = vmatpush1.msra.mxu0 %v76
    %256 = vmatprep.subr.mxu0 0.0
    %257 = vmatpush1.msra.mxu0 %v77
    %258 = vmatprep.subr.mxu0 0.0
    %259 = vmatpush1.msra.mxu0 %v78
    %260 = vmatprep.subr.mxu0 0.0
    %261 = vmatpush1.msra.mxu0 %v79
    %262 = vmatprep.subr.mxu0 0.0
    %263 = vmatpush1.msra.mxu0 %v80
    %264 = vmatprep.subr.mxu0 0.0
    %265 = vmatpush1.msra.mxu0 %v81
    %266 = vmatprep.subr.mxu0 0.0
    %267 = vmatpush1.msra.mxu0 %v82
    %268 = vmatprep.subr.mxu0 0.0
    %269 = vmatpush1.msra.mxu0 %v83
    %270 = vmatprep.subr.mxu0 0.0
    %271 = vmatpush1.msra.mxu0 %v84
    %272 = vmatprep.subr.mxu0 0.0
    %273 = vmatpush1.msra.mxu0 %v85
    %274 = vmatprep.subr.mxu0 0.0
    %275 = vmatpush1.msra.mxu0 %v86
    %276 = vmatprep.subr.mxu0 0.0
    %277 = vmatpush1.msra.mxu0 %v87
    %278 = vmatprep.subr.mxu0 0.0
    %279 = vmatpush1.msra.mxu0 %v88
    %280 = vmatprep.subr.mxu0 0.0
    %281 = vmatpush1.msra.mxu0 %v89
    %282 = vmatprep.subr.mxu0 0.0
    %283 = vmatpush1.msra.mxu0 %v90
    %284 = vmatprep.subr.mxu0 0.0
    %285 = vmatpush1.msra.mxu0 0.0
    %286 = vmatprep.subr.mxu0 0.0
    %287 = vmatpush1.msra.mxu0 0.0
    %288 = vmatprep.subr.mxu0 0.0
    %289 = vmatpush1.msra.mxu0 0.0
    %290 = vmatprep.subr.mxu0 0.0
    %291 = vmatpush1.msra.mxu0 0.0
    %292 = vmatprep.subr.mxu0 0.0
    %293 = vmatpush1.msra.mxu0 0.0
    %294 = vmatprep.subr.mxu0 0.0
    %295 = vmatpush1.msra.mxu0 0.0
    %296 = vmatprep.subr.mxu0 0.0
    %297 = vmatpush1.msra.mxu0 0.0
    %298 = vmatprep.subr.mxu0 0.0
    %299 = vmatpush1.msra.mxu0 0.0
    %300 = vmatprep.subr.mxu0 0.0
    %301 = vmatpush1.msra.mxu0 0.0
    %302 = vmatprep.subr.mxu0 0.0
    %303 = vmatpush1.msra.mxu0 0.0
    %304 = vmatprep.subr.mxu0 0.0
    %305 = vmatpush1.msra.mxu0 0.0
    %306 = vmatprep.subr.mxu0 0.0
    %307 = vmatpush1.msra.mxu0 0.0
    %308 = vmatprep.subr.mxu0 0.0
    %309 = vmatpush1.msra.mxu0 0.0
    %310 = vmatprep.subr.mxu0 0.0
    %311 = vmatpush1.msra.mxu0 0.0
    %312 = vmatprep.subr.mxu0 0.0
    %313 = vmatpush1.msra.mxu0 0.0
    %314 = vmatprep.subr.mxu0 0.0
    %315 = vmatpush1.msra.mxu0 0.0
    %316 = vmatprep.mubr.f32.mxu0 0.0
    %317 = vmatmul.mubr.f32.gmra.mrb[0].mxu0 %v93
    %v318 = vpop.f32.mrb[0].mxu0
    %v319 = vadd.f32 0.0, %v318
    %v320 = vpop.f32.mrb[0].mxu0
    %321 = vmatprep.mubr.f32.mxu0 0.0
    %322 = vmatmul.mubr.f32.gmra.mrb[0].mxu0 %v94
    %v323 = vpop.f32.mrb[0].mxu0
    %v324 = vadd.f32 0.0, %v323
    %v325 = vpop.f32.mrb[0].mxu0
    %326 = vdwg.mxu0
    %327 = vmatprep.subr.mxu0 0.0
    %328 = vmatpush1.msra.mxu0 %v319
    %329 = vmatprep.subr.mxu0 0.0
    %330 = vmatpush1.msra.mxu0 %v324
    %331 = vmatprep.subr.mxu0 0.0
    %332 = vmatpush1.msra.mxu0 0.0
    %333 = vmatprep.subr.mxu0 0.0
    %334 = vmatpush1.msra.mxu0 0.0
    %335 = vmatprep.subr.mxu0 0.0
    %336 = vmatpush1.msra.mxu0 0.0
    %337 = vmatprep.subr.mxu0 0.0
    %338 = vmatpush1.msra.mxu0 0.0
    %339 = vmatprep.subr.mxu0 0.0
    %340 = vmatpush1.msra.mxu0 0.0
    %341 = vmatprep.subr.mxu0 0.0
    %342 = vmatpush1.msra.mxu0 0.0
    %343 = vmatprep.subr.mxu0 0.0
    %344 = vmatpush1.msra.mxu0 0.0
    %345 = vmatprep.subr.mxu0 0.0
    %346 = vmatpush1.msra.mxu0 0.0
    %347 = vmatprep.subr.mxu0 0.0
    %348 = vmatpush1.msra.mxu0 0.0
    %349 = vmatprep.subr.mxu0 0.0
    %350 = vmatpush1.msra.mxu0 0.0
    %351 = vmatprep.subr.mxu0 0.0
    %352 = vmatpush1.msra.mxu0 0.0
    %353 = vmatprep.subr.mxu0 0.0
    %354 = vmatpush1.msra.mxu0 0.0
    %355 = vmatprep.subr.mxu0 0.0
    %356 = vmatpush1.msra.mxu0 0.0
    %357 = vmatprep.subr.mxu0 0.0
    %358 = vmatpush1.msra.mxu0 0.0
    %359 = vmatprep.subr.mxu0 0.0
    %360 = vmatpush1.msra.mxu0 0.0
    %361 = vmatprep.subr.mxu0 0.0
    %362 = vmatpush1.msra.mxu0 0.0
    %363 = vmatprep.subr.mxu0 0.0
    %364 = vmatpush1.msra.mxu0 0.0
    %365 = vmatprep.subr.mxu0 0.0
    %366 = vmatpush1.msra.mxu0 0.0
    %367 = vmatprep.subr.mxu0 0.0
    %368 = vmatpush1.msra.mxu0 0.0
    %369 = vmatprep.subr.mxu0 0.0
    %370 = vmatpush1.msra.mxu0 0.0
    %371 = vmatprep.subr.mxu0 0.0
    %372 = vmatpush1.msra.mxu0 0.0
    %373 = vmatprep.subr.mxu0 0.0
    %374 = vmatpush1.msra.mxu0 0.0
    %375 = vmatprep.subr.mxu0 0.0
    %376 = vmatpush1.msra.mxu0 0.0
    %377 = vmatprep.subr.mxu0 0.0
    %378 = vmatpush1.msra.mxu0 0.0
    %379 = vmatprep.subr.mxu0 0.0
    %380 = vmatpush1.msra.mxu0 0.0
    %381 = vmatprep.subr.mxu0 0.0
    %382 = vmatpush1.msra.mxu0 0.0
    %383 = vmatprep.subr.mxu0 0.0
    %384 = vmatpush1.msra.mxu0 0.0
    %385 = vmatprep.subr.mxu0 0.0
    %386 = vmatpush1.msra.mxu0 0.0
    %387 = vmatprep.subr.mxu0 0.0
    %388 = vmatpush1.msra.mxu0 0.0
    %389 = vmatprep.subr.mxu0 0.0
    %390 = vmatpush1.msra.mxu0 0.0
    %391 = vmatprep.mubr.f32.mxu0 0.0
    %392 = vmatmul.mubr.f32.gmra.mrb[0].mxu0 %v172
    %v393 = vpop.f32.mrb[0].mxu0
    %v394 = vadd.f32 0.0, %v393
    %v395 = vpop.f32.mrb[0].mxu0
    %396 = vmatprep.mubr.f32.mxu0 0.0
    %397 = vmatmul.mubr.f32.gmra.mrb[0].mxu0 %v175
    %v398 = vpop.f32.mrb[0].mxu0
    %v399 = vadd.f32 0.0, %v398
    %v400 = vpop.f32.mrb[0].mxu0
    %401 = vdwg.mxu0
    %v402 = vmul.f32 %v91, %v91
    %v403 = vmul.f32 %v92, %v92
    %404 = vmatprep.subr.mxu0 0.0
    %405 = vmatpush1.msra.mxu0 %v75
    %406 = vmatprep.subr.mxu0 0.0
    %407 = vmatpush1.msra.mxu0 %v76
    %408 = vmatprep.subr.mxu0 0.0
    %409 = vmatpush1.msra.mxu0 %v77
    %410 = vmatprep.subr.mxu0 0.0
    %411 = vmatpush1.msra.mxu0 %v78
    %412 = vmatprep.subr.mxu0 0.0
    %413 = vmatpush1.msra.mxu0 %v79
    %414 = vmatprep.subr.mxu0 0.0
    %415 = vmatpush1.msra.mxu0 %v80
    %416 = vmatprep.subr.mxu0 0.0
    %417 = vmatpush1.msra.mxu0 %v81
    %418 = vmatprep.subr.mxu0 0.0
    %419 = vmatpush1.msra.mxu0 %v82
    %420 = vmatprep.subr.mxu0 0.0
    %421 = vmatpush1.msra.mxu0 %v83
    %422 = vmatprep.subr.mxu0 0.0
    %423 = vmatpush1.msra.mxu0 %v84
    %424 = vmatprep.subr.mxu0 0.0
    %425 = vmatpush1.msra.mxu0 %v85
    %426 = vmatprep.subr.mxu0 0.0
    %427 = vmatpush1.msra.mxu0 %v86
    %428 = vmatprep.subr.mxu0 0.0
    %429 = vmatpush1.msra.mxu0 %v87
    %430 = vmatprep.subr.mxu0 0.0
    %431 = vmatpush1.msra.mxu0 %v88
    %432 = vmatprep.subr.mxu0 0.0
    %433 = vmatpush1.msra.mxu0 %v89
    %434 = vmatprep.subr.mxu0 0.0
    %435 = vmatpush1.msra.mxu0 %v90
    %436 = vmatprep.subr.mxu0 0.0
    %437 = vmatpush1.msra.mxu0 0.0
    %438 = vmatprep.subr.mxu0 0.0
    %439 = vmatpush1.msra.mxu0 0.0
    %440 = vmatprep.subr.mxu0 0.0
    %441 = vmatpush1.msra.mxu0 0.0
    %442 = vmatprep.subr.mxu0 0.0
    %443 = vmatpush1.msra.mxu0 0.0
    %444 = vmatprep.subr.mxu0 0.0
    %445 = vmatpush1.msra.mxu0 0.0
    %446 = vmatprep.subr.mxu0 0.0
    %447 = vmatpush1.msra.mxu0 0.0
    %448 = vmatprep.subr.mxu0 0.0
    %449 = vmatpush1.msra.mxu0 0.0
    %450 = vmatprep.subr.mxu0 0.0
    %451 = vmatpush1.msra.mxu0 0.0
    %452 = vmatprep.subr.mxu0 0.0
    %453 = vmatpush1.msra.mxu0 0.0
    %454 = vmatprep.subr.mxu0 0.0
    %455 = vmatpush1.msra.mxu0 0.0
    %456 = vmatprep.subr.mxu0 0.0
    %457 = vmatpush1.msra.mxu0 0.0
    %458 = vmatprep.subr.mxu0 0.0
    %459 = vmatpush1.msra.mxu0 0.0
    %460 = vmatprep.subr.mxu0 0.0
    %461 = vmatpush1.msra.mxu0 0.0
    %462 = vmatprep.subr.mxu0 0.0
    %463 = vmatpush1.msra.mxu0 0.0
    %464 = vmatprep.subr.mxu0 0.0
    %465 = vmatpush1.msra.mxu0 0.0
    %466 = vmatprep.subr.mxu0 0.0
    %467 = vmatpush1.msra.mxu0 0.0
    %468 = vmatprep.mubr.f32.mxu0 0.0
    %469 = vmatmul.mubr.f32.gmra.mrb[0].mxu0 %v402
    %v470 = vpop.f32.mrb[0].mxu0
    %v471 = vadd.f32 0.0, %v470
    %v472 = vpop.f32.mrb[0].mxu0
    %473 = vmatprep.mubr.f32.mxu0 0.0
    %474 = vmatmul.mubr.f32.gmra.mrb[0].mxu0 %v403
    %v475 = vpop.f32.mrb[0].mxu0
    %v476 = vadd.f32 0.0, %v475
    %v477 = vpop.f32.mrb[0].mxu0
    %478 = vdwg.mxu0
    %479 = vmatprep.subr.mxu0 0.0
    %480 = vmatpush1.msra.mxu0 %v471
    %481 = vmatprep.subr.mxu0 0.0
    %482 = vmatpush1.msra.mxu0 %v476
    %483 = vmatprep.subr.mxu0 0.0
    %484 = vmatpush1.msra.mxu0 0.0
    %485 = vmatprep.subr.mxu0 0.0
    %486 = vmatpush1.msra.mxu0 0.0
    %487 = vmatprep.subr.mxu0 0.0
    %488 = vmatpush1.msra.mxu0 0.0
    %489 = vmatprep.subr.mxu0 0.0
    %490 = vmatpush1.msra.mxu0 0.0
    %491 = vmatprep.subr.mxu0 0.0
    %492 = vmatpush1.msra.mxu0 0.0
    %493 = vmatprep.subr.mxu0 0.0
    %494 = vmatpush1.msra.mxu0 0.0
    %495 = vmatprep.subr.mxu0 0.0
    %496 = vmatpush1.msra.mxu0 0.0
    %497 = vmatprep.subr.mxu0 0.0
    %498 = vmatpush1.msra.mxu0 0.0
    %499 = vmatprep.subr.mxu0 0.0
    %500 = vmatpush1.msra.mxu0 0.0
    %501 = vmatprep.subr.mxu0 0.0
    %502 = vmatpush1.msra.mxu0 0.0
    %503 = vmatprep.subr.mxu0 0.0
    %504 = vmatpush1.msra.mxu0 0.0
    %505 = vmatprep.subr.mxu0 0.0
    %506 = vmatpush1.msra.mxu0 0.0
    %507 = vmatprep.subr.mxu0 0.0
    %508 = vmatpush1.msra.mxu0 0.0
    %509 = vmatprep.subr.mxu0 0.0
    %510 = vmatpush1.msra.mxu0 0.0
    %511 = vmatprep.subr.mxu0 0.0
    %512 = vmatpush1.msra.mxu0 0.0
    %513 = vmatprep.subr.mxu0 0.0
    %514 = vmatpush1.msra.mxu0 0.0
    %515 = vmatprep.subr.mxu0 0.0
    %516 = vmatpush1.msra.mxu0 0.0
    %517 = vmatprep.subr.mxu0 0.0
    %518 = vmatpush1.msra.mxu0 0.0
    %519 = vmatprep.subr.mxu0 0.0
    %520 = vmatpush1.msra.mxu0 0.0
    %521 = vmatprep.subr.mxu0 0.0
    %522 = vmatpush1.msra.mxu0 0.0
    %523 = vmatprep.subr.mxu0 0.0
    %524 = vmatpush1.msra.mxu0 0.0
    %525 = vmatprep.subr.mxu0 0.0
    %526 = vmatpush1.msra.mxu0 0.0
    %527 = vmatprep.subr.mxu0 0.0
    %528 = vmatpush1.msra.mxu0 0.0
    %529 = vmatprep.subr.mxu0 0.0
    %530 = vmatpush1.msra.mxu0 0.0
    %531 = vmatprep.subr.mxu0 0.0
    %532 = vmatpush1.msra.mxu0 0.0
    %533 = vmatprep.subr.mxu0 0.0
    %534 = vmatpush1.msra.mxu0 0.0
    %535 = vmatprep.subr.mxu0 0.0
    %536 = vmatpush1.msra.mxu0 0.0
    %537 = vmatprep.subr.mxu0 0.0
    %538 = vmatpush1.msra.mxu0 0.0
    %539 = vmatprep.subr.mxu0 0.0
    %540 = vmatpush1.msra.mxu0 0.0
    %541 = vmatprep.subr.mxu0 0.0
    %542 = vmatpush1.msra.mxu0 0.0
    %543 = vmatprep.mubr.f32.mxu0 0.0
    %544 = vmatmul.mubr.f32.gmra.mrb[0].mxu0 %v172
    %v545 = vpop.f32.mrb[0].mxu0
    %v546 = vadd.f32 0.0, %v545
    %v547 = vpop.f32.mrb[0].mxu0
    %548 = vmatprep.mubr.f32.mxu0 0.0
    %549 = vmatmul.mubr.f32.gmra.mrb[0].mxu0 %v175
    %v550 = vpop.f32.mrb[0].mxu0
    %v551 = vadd.f32 0.0, %v550
    %v552 = vpop.f32.mrb[0].mxu0
    %553 = vdwg.mxu0
    %v554 = vmul.f32 %v93, %v93
    %v555 = vmul.f32 %v94, %v94
    %556 = vmatprep.subr.mxu0 0.0
    %557 = vmatpush1.msra.mxu0 %v75
    %558 = vmatprep.subr.mxu0 0.0
    %559 = vmatpush1.msra.mxu0 %v76
    %560 = vmatprep.subr.mxu0 0.0
    %561 = vmatpush1.msra.mxu0 %v77
    %562 = vmatprep.subr.mxu0 0.0
    %563 = vmatpush1.msra.mxu0 %v78
    %564 = vmatprep.subr.mxu0 0.0
    %565 = vmatpush1.msra.mxu0 %v79
    %566 = vmatprep.subr.mxu0 0.0
    %567 = vmatpush1.msra.mxu0 %v80
    %568 = vmatprep.subr.mxu0 0.0
    %569 = vmatpush1.msra.mxu0 %v81
    %570 = vmatprep.subr.mxu0 0.0
    %571 = vmatpush1.msra.mxu0 %v82
    %572 = vmatprep.subr.mxu0 0.0
    %573 = vmatpush1.msra.mxu0 %v83
    %574 = vmatprep.subr.mxu0 0.0
    %575 = vmatpush1.msra.mxu0 %v84
    %576 = vmatprep.subr.mxu0 0.0
    %577 = vmatpush1.msra.mxu0 %v85
    %578 = vmatprep.subr.mxu0 0.0
    %579 = vmatpush1.msra.mxu0 %v86
    %580 = vmatprep.subr.mxu0 0.0
    %581 = vmatpush1.msra.mxu0 %v87
    %582 = vmatprep.subr.mxu0 0.0
    %583 = vmatpush1.msra.mxu0 %v88
    %584 = vmatprep.subr.mxu0 0.0
    %585 = vmatpush1.msra.mxu0 %v89
    %586 = vmatprep.subr.mxu0 0.0
    %587 = vmatpush1.msra.mxu0 %v90
    %588 = vmatprep.subr.mxu0 0.0
    %589 = vmatpush1.msra.mxu0 0.0
    %590 = vmatprep.subr.mxu0 0.0
    %591 = vmatpush1.msra.mxu0 0.0
    %592 = vmatprep.subr.mxu0 0.0
    %593 = vmatpush1.msra.mxu0 0.0
    %594 = vmatprep.subr.mxu0 0.0
    %595 = vmatpush1.msra.mxu0 0.0
    %596 = vmatprep.subr.mxu0 0.0
    %597 = vmatpush1.msra.mxu0 0.0
    %598 = vmatprep.subr.mxu0 0.0
    %599 = vmatpush1.msra.mxu0 0.0
    %600 = vmatprep.subr.mxu0 0.0
    %601 = vmatpush1.msra.mxu0 0.0
    %602 = vmatprep.subr.mxu0 0.0
    %603 = vmatpush1.msra.mxu0 0.0
    %604 = vmatprep.subr.mxu0 0.0
    %605 = vmatpush1.msra.mxu0 0.0
    %606 = vmatprep.subr.mxu0 0.0
    %607 = vmatpush1.msra.mxu0 0.0
    %608 = vmatprep.subr.mxu0 0.0
    %609 = vmatpush1.msra.mxu0 0.0
    %610 = vmatprep.subr.mxu0 0.0
    %611 = vmatpush1.msra.mxu0 0.0
    %612 = vmatprep.subr.mxu0 0.0
    %613 = vmatpush1.msra.mxu0 0.0
    %614 = vmatprep.subr.mxu0 0.0
    %615 = vmatpush1.msra.mxu0 0.0
    %616 = vmatprep.subr.mxu0 0.0
    %617 = vmatpush1.msra.mxu0 0.0
    %618 = vmatprep.subr.mxu0 0.0
    %619 = vmatpush1.msra.mxu0 0.0
    %620 = vmatprep.mubr.f32.mxu0 0.0
    %621 = vmatmul.mubr.f32.gmra.mrb[0].mxu0 %v554
    %v622 = vpop.f32.mrb[0].mxu0
    %v623 = vadd.f32 0.0, %v622
    %v624 = vpop.f32.mrb[0].mxu0
    %625 = vmatprep.mubr.f32.mxu0 0.0
    %626 = vmatmul.mubr.f32.gmra.mrb[0].mxu0 %v555
    %v627 = vpop.f32.mrb[0].mxu0
    %v628 = vadd.f32 0.0, %v627
    %v629 = vpop.f32.mrb[0].mxu0
    %630 = vdwg.mxu0
    %631 = vmatprep.subr.mxu0 0.0
    %632 = vmatpush1.msra.mxu0 %v623
    %633 = vmatprep.subr.mxu0 0.0
    %634 = vmatpush1.msra.mxu0 %v628
    %635 = vmatprep.subr.mxu0 0.0
    %636 = vmatpush1.msra.mxu0 0.0
    %637 = vmatprep.subr.mxu0 0.0
    %638 = vmatpush1.msra.mxu0 0.0
    %639 = vmatprep.subr.mxu0 0.0
    %640 = vmatpush1.msra.mxu0 0.0
    %641 = vmatprep.subr.mxu0 0.0
    %642 = vmatpush1.msra.mxu0 0.0
    %643 = vmatprep.subr.mxu0 0.0
    %644 = vmatpush1.msra.mxu0 0.0
    %645 = vmatprep.subr.mxu0 0.0
    %646 = vmatpush1.msra.mxu0 0.0
    %647 = vmatprep.subr.mxu0 0.0
    %648 = vmatpush1.msra.mxu0 0.0
    %649 = vmatprep.subr.mxu0 0.0
    %650 = vmatpush1.msra.mxu0 0.0
    %651 = vmatprep.subr.mxu0 0.0
    %652 = vmatpush1.msra.mxu0 0.0
    %653 = vmatprep.subr.mxu0 0.0
    %654 = vmatpush1.msra.mxu0 0.0
    %655 = vmatprep.subr.mxu0 0.0
    %656 = vmatpush1.msra.mxu0 0.0
    %657 = vmatprep.subr.mxu0 0.0
    %658 = vmatpush1.msra.mxu0 0.0
    %659 = vmatprep.subr.mxu0 0.0
    %660 = vmatpush1.msra.mxu0 0.0
    %661 = vmatprep.subr.mxu0 0.0
    %662 = vmatpush1.msra.mxu0 0.0
    %663 = vmatprep.subr.mxu0 0.0
    %664 = vmatpush1.msra.mxu0 0.0
    %665 = vmatprep.subr.mxu0 0.0
    %666 = vmatpush1.msra.mxu0 0.0
    %667 = vmatprep.subr.mxu0 0.0
    %668 = vmatpush1.msra.mxu0 0.0
    %669 = vmatprep.subr.mxu0 0.0
    %670 = vmatpush1.msra.mxu0 0.0
    %671 = vmatprep.subr.mxu0 0.0
    %672 = vmatpush1.msra.mxu0 0.0
    %673 = vmatprep.subr.mxu0 0.0
    %674 = vmatpush1.msra.mxu0 0.0
    %675 = vmatprep.subr.mxu0 0.0
    %676 = vmatpush1.msra.mxu0 0.0
    %677 = vmatprep.subr.mxu0 0.0
    %678 = vmatpush1.msra.mxu0 0.0
    %679 = vmatprep.subr.mxu0 0.0
    %680 = vmatpush1.msra.mxu0 0.0
    %681 = vmatprep.subr.mxu0 0.0
    %682 = vmatpush1.msra.mxu0 0.0
    %683 = vmatprep.subr.mxu0 0.0
    %684 = vmatpush1.msra.mxu0 0.0
    %685 = vmatprep.subr.mxu0 0.0
    %686 = vmatpush1.msra.mxu0 0.0
    %687 = vmatprep.subr.mxu0 0.0
    %688 = vmatpush1.msra.mxu0 0.0
    %689 = vmatprep.subr.mxu0 0.0
    %690 = vmatpush1.msra.mxu0 0.0
    %691 = vmatprep.subr.mxu0 0.0
    %692 = vmatpush1.msra.mxu0 0.0
    %693 = vmatprep.subr.mxu0 0.0
    %694 = vmatpush1.msra.mxu0 0.0
    %695 = vmatprep.mubr.f32.mxu0 0.0
    %696 = vmatmul.mubr.f32.gmra.mrb[0].mxu0 %v172
    %v697 = vpop.f32.mrb[0].mxu0
    %v698 = vadd.f32 0.0, %v697
    %v699 = vpop.f32.mrb[0].mxu0
    %700 = vmatprep.mubr.f32.mxu0 0.0
    %701 = vmatmul.mubr.f32.gmra.mrb[0].mxu0 %v175
    %v702 = vpop.f32.mrb[0].mxu0
    %v703 = vadd.f32 0.0, %v702
    %v704 = vpop.f32.mrb[0].mxu0
    %705 = vdwg.mxu0
    %v706 = vmul.f32 %v91, %v93
    %v707 = vmul.f32 %v92, %v94
    %708 = vmatprep.subr.mxu0 0.0
    %709 = vmatpush1.msra.mxu0 %v75
    %710 = vmatprep.subr.mxu0 0.0
    %711 = vmatpush1.msra.mxu0 %v76
    %712 = vmatprep.subr.mxu0 0.0
    %713 = vmatpush1.msra.mxu0 %v77
    %714 = vmatprep.subr.mxu0 0.0
    %715 = vmatpush1.msra.mxu0 %v78
    %716 = vmatprep.subr.mxu0 0.0
    %717 = vmatpush1.msra.mxu0 %v79
    %718 = vmatprep.subr.mxu0 0.0
    %719 = vmatpush1.msra.mxu0 %v80
    %720 = vmatprep.subr.mxu0 0.0
    %721 = vmatpush1.msra.mxu0 %v81
    %722 = vmatprep.subr.mxu0 0.0
    %723 = vmatpush1.msra.mxu0 %v82
    %724 = vmatprep.subr.mxu0 0.0
    %725 = vmatpush1.msra.mxu0 %v83
    %726 = vmatprep.subr.mxu0 0.0
    %727 = vmatpush1.msra.mxu0 %v84
    %728 = vmatprep.subr.mxu0 0.0
    %729 = vmatpush1.msra.mxu0 %v85
    %730 = vmatprep.subr.mxu0 0.0
    %731 = vmatpush1.msra.mxu0 %v86
    %732 = vmatprep.subr.mxu0 0.0
    %733 = vmatpush1.msra.mxu0 %v87
    %734 = vmatprep.subr.mxu0 0.0
    %735 = vmatpush1.msra.mxu0 %v88
    %736 = vmatprep.subr.mxu0 0.0
    %737 = vmatpush1.msra.mxu0 %v89
    %738 = vmatprep.subr.mxu0 0.0
    %739 = vmatpush1.msra.mxu0 %v90
    %740 = vmatprep.subr.mxu0 0.0
    %741 = vmatpush1.msra.mxu0 0.0
    %742 = vmatprep.subr.mxu0 0.0
    %743 = vmatpush1.msra.mxu0 0.0
    %744 = vmatprep.subr.mxu0 0.0
    %745 = vmatpush1.msra.mxu0 0.0
    %746 = vmatprep.subr.mxu0 0.0
    %747 = vmatpush1.msra.mxu0 0.0
    %748 = vmatprep.subr.mxu0 0.0
    %749 = vmatpush1.msra.mxu0 0.0
    %750 = vmatprep.subr.mxu0 0.0
    %751 = vmatpush1.msra.mxu0 0.0
    %752 = vmatprep.subr.mxu0 0.0
    %753 = vmatpush1.msra.mxu0 0.0
    %754 = vmatprep.subr.mxu0 0.0
    %755 = vmatpush1.msra.mxu0 0.0
    %756 = vmatprep.subr.mxu0 0.0
    %757 = vmatpush1.msra.mxu0 0.0
    %758 = vmatprep.subr.mxu0 0.0
    %759 = vmatpush1.msra.mxu0 0.0
    %760 = vmatprep.subr.mxu0 0.0
    %761 = vmatpush1.msra.mxu0 0.0
    %762 = vmatprep.subr.mxu0 0.0
    %763 = vmatpush1.msra.mxu0 0.0
    %764 = vmatprep.subr.mxu0 0.0
    %765 = vmatpush1.msra.mxu0 0.0
    %766 = vmatprep.subr.mxu0 0.0
    %767 = vmatpush1.msra.mxu0 0.0
    %768 = vmatprep.subr.mxu0 0.0
    %769 = vmatpush1.msra.mxu0 0.0
    %770 = vmatprep.subr.mxu0 0.0
    %771 = vmatpush1.msra.mxu0 0.0
    %772 = vmatprep.mubr.f32.mxu0 0.0
    %773 = vmatmul.mubr.f32.gmra.mrb[0].mxu0 %v706
    %v774 = vpop.f32.mrb[0].mxu0
    %v775 = vadd.f32 0.0, %v774
    %v776 = vpop.f32.mrb[0].mxu0
    %777 = vmatprep.mubr.f32.mxu0 0.0
    %778 = vmatmul.mubr.f32.gmra.mrb[0].mxu0 %v707
    %v779 = vpop.f32.mrb[0].mxu0
    %v780 = vadd.f32 0.0, %v779
    %v781 = vpop.f32.mrb[0].mxu0
    %782 = vdwg.mxu0
    %783 = vmatprep.subr.mxu0 0.0
    %784 = vmatpush1.msra.mxu0 %v775
    %785 = vmatprep.subr.mxu0 0.0
    %786 = vmatpush1.msra.mxu0 %v780
    %787 = vmatprep.subr.mxu0 0.0
    %788 = vmatpush1.msra.mxu0 0.0
    %789 = vmatprep.subr.mxu0 0.0
    %790 = vmatpush1.msra.mxu0 0.0
    %791 = vmatprep.subr.mxu0 0.0
    %792 = vmatpush1.msra.mxu0 0.0
    %793 = vmatprep.subr.mxu0 0.0
    %794 = vmatpush1.msra.mxu0 0.0
    %795 = vmatprep.subr.mxu0 0.0
    %796 = vmatpush1.msra.mxu0 0.0
    %797 = vmatprep.subr.mxu0 0.0
    %798 = vmatpush1.msra.mxu0 0.0
    %799 = vmatprep.subr.mxu0 0.0
    %800 = vmatpush1.msra.mxu0 0.0
    %801 = vmatprep.subr.mxu0 0.0
    %802 = vmatpush1.msra.mxu0 0.0
    %803 = vmatprep.subr.mxu0 0.0
    %804 = vmatpush1.msra.mxu0 0.0
    %805 = vmatprep.subr.mxu0 0.0
    %806 = vmatpush1.msra.mxu0 0.0
    %807 = vmatprep.subr.mxu0 0.0
    %808 = vmatpush1.msra.mxu0 0.0
    %809 = vmatprep.subr.mxu0 0.0
    %810 = vmatpush1.msra.mxu0 0.0
    %811 = vmatprep.subr.mxu0 0.0
    %812 = vmatpush1.msra.mxu0 0.0
    %813 = vmatprep.subr.mxu0 0.0
    %814 = vmatpush1.msra.mxu0 0.0
    %815 = vmatprep.subr.mxu0 0.0
    %816 = vmatpush1.msra.mxu0 0.0
    %817 = vmatprep.subr.mxu0 0.0
    %818 = vmatpush1.msra.mxu0 0.0
    %819 = vmatprep.subr.mxu0 0.0
    %820 = vmatpush1.msra.mxu0 0.0
    %821 = vmatprep.subr.mxu0 0.0
    %822 = vmatpush1.msra.mxu0 0.0
    %823 = vmatprep.subr.mxu0 0.0
    %824 = vmatpush1.msra.mxu0 0.0
    %825 = vmatprep.subr.mxu0 0.0
    %826 = vmatpush1.msra.mxu0 0.0
    %827 = vmatprep.subr.mxu0 0.0
    %828 = vmatpush1.msra.mxu0 0.0
    %829 = vmatprep.subr.mxu0 0.0
    %830 = vmatpush1.msra.mxu0 0.0
    %831 = vmatprep.subr.mxu0 0.0
    %832 = vmatpush1.msra.mxu0 0.0
    %833 = vmatprep.subr.mxu0 0.0
    %834 = vmatpush1.msra.mxu0 0.0
    %835 = vmatprep.subr.mxu0 0.0
    %836 = vmatpush1.msra.mxu0 0.0
    %837 = vmatprep.subr.mxu0 0.0
    %838 = vmatpush1.msra.mxu0 0.0
    %839 = vmatprep.subr.mxu0 0.0
    %840 = vmatpush1.msra.mxu0 0.0
    %841 = vmatprep.subr.mxu0 0.0
    %842 = vmatpush1.msra.mxu0 0.0
    %843 = vmatprep.subr.mxu0 0.0
    %844 = vmatpush1.msra.mxu0 0.0
    %845 = vmatprep.subr.mxu0 0.0
    %846 = vmatpush1.msra.mxu0 0.0
    %847 = vmatprep.mubr.f32.mxu0 0.0
    %848 = vmatmul.mubr.f32.gmra.mrb[0].mxu0 %v172
    %v849 = vpop.f32.mrb[0].mxu0
    %v850 = vadd.f32 0.0, %v849
    %v851 = vpop.f32.mrb[0].mxu0
    %852 = vmatprep.mubr.f32.mxu0 0.0
    %853 = vmatmul.mubr.f32.gmra.mrb[0].mxu0 %v175
    %v854 = vpop.f32.mrb[0].mxu0
    %v855 = vadd.f32 0.0, %v854
    %v856 = vpop.f32.mrb[0].mxu0
    %857 = vdwg.mxu0
    %v858 = vmul.f32 %v244, %v244
    %v859 = vmul.f32 %v249, %v249
    %v860 = vmul.f32 %v394, %v394
    %v861 = vmul.f32 %v399, %v399
    %v862 = vmul.f32 %v244, %v394
    %v863 = vmul.f32 %v249, %v399
    %v864 = vsub.f32 %v546, %v858
    %v865 = vsub.f32 %v551, %v859
    %v866 = vand.u32 2147483647, %v864
    %v867 = vand.u32 2147483647, %v865
    %v868 = vsub.f32 %v698, %v860
    %v869 = vsub.f32 %v703, %v861
    %v870 = vand.u32 2147483647, %v868
    %v871 = vand.u32 2147483647, %v869
    %v872 = vsub.f32 %v850, %v862
    %v873 = vsub.f32 %v855, %v863
    %v874 = vmul.f32 %v862, 2.0
    %v875 = vmul.f32 %v863, 2.0
    %v876 = vadd.f32 %v874, 0.0001
    %v877 = vadd.f32 %v875, 0.0001
    %v878 = vmul.f32 %v872, 2.0
    %v879 = vmul.f32 %v873, 2.0
    %v880 = vadd.f32 %v878, 0.0009
    %v881 = vadd.f32 %v879, 0.0009
    %v882 = vmul.f32 %v876, %v880
    %v883 = vmul.f32 %v877, %v881
    %v884 = vadd.f32 %v858, %v860
    %v885 = vadd.f32 %v859, %v861
    %v886 = vadd.f32 %v884, 0.0001
    %v887 = vadd.f32 %v885, 0.0001
    %v888 = vadd.f32 %v866, %v870
    %v889 = vadd.f32 %v867, %v871
    %v890 = vadd.f32 %v888, 0.0009
    %v891 = vadd.f32 %v889, 0.0009
    %v892 = vmul.f32 %v886, %v890
    %v893 = vmul.f32 %v887, %v891
    %v894 = vrcp.pop %v892
    %v895 = vrcp.pop %v893
    %v896 = vmul.f32 %v882, %v894
    %v897 = vmul.f32 %v883, %v895
    %v898 = vmax.f32 %v896, -1.0
    %v899 = vmax.f32 %v897, -1.0
    %v900 = vmin.f32 %v898, 1.0
    %v901 = vmin.f32 %v899, 1.0
    %v902 = vadd.f32 %v900, 1.0
    %v903 = vadd.f32 %v901, 1.0
    %v904 = vmul.f32 %v902, 0.5
    %v905 = vmul.f32 %v903, 0.5
    %v906 = vsub.f32 1.0, %v904
    %v907 = vsub.f32 1.0, %v905
    %908 = vst [vmem:[#allocation10] sm:$0xff] %v906
    %909 = vst [vmem:[#allocation10 + $0x8] sm:$0xff] %v907
    // Predicated region
    $region34: #{tpu_custom_call.1} parent=1 // pred_check
      _
    $region35: #{tpu_custom_call.1} parent=1 // pred_check_branch
      %911 = sbr.rel (0) target = $region37
    $region36: #{tpu_custom_call.1} parent=1 // pred_region
      %s913 = ssub.s32 256, 256
      %914 = vsyncadd [#allocation4], %s913
      %s915 = sshll.u32 [#allocation10], 4
      %s916 = int_to_ptr.vmem [resolvable:$true] %s915
      %921 = dma.vmem_to_hbm [thread:$0]  %s916, 256, %s4, [#allocation4], 128, 128, 8
    $region37: #{tpu_custom_call.1} parent=1 // pred_fallthru
      _
    // Predicated region
    $region38: #{tpu_custom_call.1} parent=1 // pred_check
      _
    $region39: #{tpu_custom_call.1} parent=1 // pred_check_branch
      %923 = sbr.rel (0) target = $region41
    $region40: #{tpu_custom_call.1} parent=1 // pred_region
      %924 = dma.done [#allocation4], 256
    $region41: #{tpu_custom_call.1} parent=1 // pred_fallthru
      _
    %925 = vsyncpa [#allocation3], 1
    %926 = vsyncpa [#allocation6], 1
    %927 = vsyncpa [#allocation9], 1
    %928 = vsyncpa [#allocation4], 1

// kernel: tpu_custom_call.1
$region0: #{tpu_custom_call.1}
  #allocation0 [shape = 'u32[]', space=smem, size = 0x4, offset = 0x4, fixed_abs, tag = 'smem constant byte address 0x4 - core index']
  #allocation1 [shape = 'u32[144,128]{1,0:T(1,128)}', space=vmem, size = 0x12000, scoped, tag = 'internal scratch']
  %s0 = inlined_call_operand.hbm [shape: f32[16,16], index: 0, kind: input, shape index: {}]
  %s1 = inlined_call_operand.hbm [shape: f32[128,128], index: 1, kind: input, shape index: {}]
  %s2 = inlined_call_operand.hbm [shape: f32[1,16,128], index: 2, kind: input, shape index: {}]
  %s3 = inlined_call_operand.hbm [shape: f32[1,16,128], index: 3, kind: input, shape index: {}]
  %s4 = inlined_call_operand.hbm [shape: f32[1,16,128], index: 4, kind: output, shape index: {}]
  %s5 = sld [smem:[#allocation0]]
  $region42: #{tpu_custom_call.1} parent=0
    _
  %s7 = ssub.s32 1, %s5
  %s8 = scalar_select 0, %s7, %s5
  $region1: #{tpu_custom_call.1} parent=0
    #allocation2 [shape = 'u8[8192]{0}', space=vmem, size = 0x2000, scoped, tag = 'input window, operand 0, single buffered']
    #allocation3 [shape = 's32[1]{0}', space=sflag, size = 0x4, scoped, tag = 'scoped memory for tpu_custom_call.1']
    #allocation4 [shape = 's32[1]{0}', space=sflag, size = 0x4, scoped, tag = 'scoped memory for tpu_custom_call.1']
    #allocation5 [shape = 'u8[65536]{0}', space=vmem, size = 0x10000, scoped, tag = 'input window, operand 1, single buffered']
    #allocation6 [shape = 's32[1]{0}', space=sflag, size = 0x4, scoped, tag = 'scoped memory for tpu_custom_call.1']
    #allocation7 [shape = 'u8[8192]{0}', space=vmem, size = 0x2000, scoped, tag = 'input window, operand 2, single buffered']
    #allocation8 [shape = 'u8[8192]{0}', space=vmem, size = 0x2000, scoped, tag = 'input window, operand 3, single buffered']
    #allocation9 [shape = 's32[1]{0}', space=sflag, size = 0x4, scoped, tag = 'scoped memory for tpu_custom_call.1']
    #allocation10 [shape = 'u8[8192]{0}', space=vmem, size = 0x2000, scoped, tag = 'output window, operand 0, single buffered']
    %9 = vsyncpa [#allocation3], 0
    %10 = vsyncpa [#allocation6], 0
    %11 = vsyncpa [#allocation9], 0
    %12 = vsyncpa [#allocation4], 0
    // Predicated region
    $region2: #{tpu_custom_call.1} parent=1 // pred_check
      _
    $region3: #{tpu_custom_call.1} parent=1 // pred_check_branch
      %14 = sbr.rel (0) target = $region5
    $region4: #{tpu_custom_call.1} parent=1 // pred_region
      %s16 = ssub.s32 256, 256
      %17 = vsyncadd [#allocation3], %s16
      %s18 = sshll.u32 [#allocation2], 4
      %s19 = int_to_ptr.vmem [resolvable:$true] %s18
      %24 = dma.hbm_to_vmem [thread:$0]  %s0, 256, %s19, [#allocation3], 128, 128, 8
    $region5: #{tpu_custom_call.1} parent=1 // pred_fallthru
      _
    // Predicated region
    $region6: #{tpu_custom_call.1} parent=1 // pred_check
      _
    $region7: #{tpu_custom_call.1} parent=1 // pred_check_branch
      %26 = sbr.rel (0) target = $region9
    $region8: #{tpu_custom_call.1} parent=1 // pred_region
      %s28 = ssub.s32 2048, 2048
      %29 = vsyncadd [#allocation6], %s28
      %s30 = sshll.u32 [#allocation5], 4
      %s31 = int_to_ptr.vmem [resolvable:$true] %s30
      %36 = dma.hbm_to_vmem [thread:$0]  %s1, 2048, %s31, [#allocation6], 128, 128, 8
    $region9: #{tpu_custom_call.1} parent=1 // pred_fallthru
      _
    // Predicated region
    $region10: #{tpu_custom_call.1} parent=1 // pred_check
      _
    $region11: #{tpu_custom_call.1} parent=1 // pred_check_branch
      %38 = sbr.rel (0) target = $region13
    $region12: #{tpu_custom_call.1} parent=1 // pred_region
      %s40 = ssub.s32 256, 256
      %41 = vsyncadd [#allocation6], %s40
      %s42 = sshll.u32 [#allocation7], 4
      %s43 = int_to_ptr.vmem [resolvable:$true] %s42
      %48 = dma.hbm_to_vmem [thread:$0]  %s2, 256, %s43, [#allocation6], 128, 128, 8
    $region13: #{tpu_custom_call.1} parent=1 // pred_fallthru
      _
    // Predicated region
    $region14: #{tpu_custom_call.1} parent=1 // pred_check
      _
    $region15: #{tpu_custom_call.1} parent=1 // pred_check_branch
      %50 = sbr.rel (0) target = $region17
    $region16: #{tpu_custom_call.1} parent=1 // pred_region
      %s52 = ssub.s32 256, 256
      %53 = vsyncadd [#allocation9], %s52
      %s54 = sshll.u32 [#allocation8], 4
      %s55 = int_to_ptr.vmem [resolvable:$true] %s54
      %60 = dma.hbm_to_vmem [thread:$0]  %s3, 256, %s55, [#allocation9], 128, 128, 8
    $region17: #{tpu_custom_call.1} parent=1 // pred_fallthru
      _
    // Predicated region
    $region18: #{tpu_custom_call.1} parent=1 // pred_check
      _
    $region19: #{tpu_custom_call.1} parent=1 // pred_check_branch
      %62 = sbr.rel (0) target = $region21
    $region20: #{tpu_custom_call.1} parent=1 // pred_region
      %63 = dma.done [#allocation3], 256
    $region21: #{tpu_custom_call.1} parent=1 // pred_fallthru
      _
    // Predicated region
    $region22: #{tpu_custom_call.1} parent=1 // pred_check
      _
    $region23: #{tpu_custom_call.1} parent=1 // pred_check_branch
      %65 = sbr.rel (0) target = $region25
    $region24: #{tpu_custom_call.1} parent=1 // pred_region
      %66 = dma.done [#allocation6], 2048
    $region25: #{tpu_custom_call.1} parent=1 // pred_fallthru
      _
    // Predicated region
    $region26: #{tpu_custom_call.1} parent=1 // pred_check
      _
    $region27: #{tpu_custom_call.1} parent=1 // pred_check_branch
      %68 = sbr.rel (0) target = $region29
    $region28: #{tpu_custom_call.1} parent=1 // pred_region
      %69 = dma.done [#allocation6], 256
    $region29: #{tpu_custom_call.1} parent=1 // pred_fallthru
      _
    // Predicated region
    $region30: #{tpu_custom_call.1} parent=1 // pred_check
      _
    $region31: #{tpu_custom_call.1} parent=1 // pred_check_branch
      %71 = sbr.rel (0) target = $region33
    $region32: #{tpu_custom_call.1} parent=1 // pred_region
      %72 = dma.done [#allocation9], 256
    $region33: #{tpu_custom_call.1} parent=1 // pred_fallthru
      _
    %v73 = vld [vmem:[#allocation2] sm:$0xff]
    %v74 = vld [vmem:[#allocation2 + $0x8] sm:$0xff]
    %v75 = vld [vmem:[#allocation5] sm:$0xff]
    %v76 = vld [vmem:[#allocation5 + $0x8] sm:$0xff]
    %v77 = vld [vmem:[#allocation5 + $0x10] sm:$0xff]
    %v78 = vld [vmem:[#allocation5 + $0x18] sm:$0xff]
    %v79 = vld [vmem:[#allocation5 + $0x20] sm:$0xff]
    %v80 = vld [vmem:[#allocation5 + $0x28] sm:$0xff]
    %v81 = vld [vmem:[#allocation5 + $0x30] sm:$0xff]
    %v82 = vld [vmem:[#allocation5 + $0x38] sm:$0xff]
    %v83 = vld [vmem:[#allocation5 + $0x40] sm:$0xff]
    %v84 = vld [vmem:[#allocation5 + $0x48] sm:$0xff]
    %v85 = vld [vmem:[#allocation5 + $0x50] sm:$0xff]
    %v86 = vld [vmem:[#allocation5 + $0x58] sm:$0xff]
    %v87 = vld [vmem:[#allocation5 + $0x60] sm:$0xff]
    %v88 = vld [vmem:[#allocation5 + $0x68] sm:$0xff]
    %v89 = vld [vmem:[#allocation5 + $0x70] sm:$0xff]
    %v90 = vld [vmem:[#allocation5 + $0x78] sm:$0xff]
    %v91 = vld [vmem:[#allocation7] sm:$0xff]
    %v92 = vld [vmem:[#allocation7 + $0x8] sm:$0xff]
    %v93 = vld [vmem:[#allocation8] sm:$0xff]
    %v94 = vld [vmem:[#allocation8 + $0x8] sm:$0xff]
    %95 = vmatprep.subr.mxu0 0.0
    %96 = vmatpush1.msra.mxu0 %v75
    %97 = vmatprep.subr.mxu0 0.0
    %98 = vmatpush1.msra.mxu0 %v76
    %99 = vmatprep.subr.mxu0 0.0
    %100 = vmatpush1.msra.mxu0 %v77
    %101 = vmatprep.subr.mxu0 0.0
    %102 = vmatpush1.msra.mxu0 %v78
    %103 = vmatprep.subr.mxu0 0.0
    %104 = vmatpush1.msra.mxu0 %v79
    %105 = vmatprep.subr.mxu0 0.0
    %106 = vmatpush1.msra.mxu0 %v80
    %107 = vmatprep.subr.mxu0 0.0
    %108 = vmatpush1.msra.mxu0 %v81
    %109 = vmatprep.subr.mxu0 0.0
    %110 = vmatpush1.msra.mxu0 %v82
    %111 = vmatprep.subr.mxu0 0.0
    %112 = vmatpush1.msra.mxu0 %v83
    %113 = vmatprep.subr.mxu0 0.0
    %114 = vmatpush1.msra.mxu0 %v84
    %115 = vmatprep.subr.mxu0 0.0
    %116 = vmatpush1.msra.mxu0 %v85
    %117 = vmatprep.subr.mxu0 0.0
    %118 = vmatpush1.msra.mxu0 %v86
    %119 = vmatprep.subr.mxu0 0.0
    %120 = vmatpush1.msra.mxu0 %v87
    %121 = vmatprep.subr.mxu0 0.0
    %122 = vmatpush1.msra.mxu0 %v88
    %123 = vmatprep.subr.mxu0 0.0
    %124 = vmatpush1.msra.mxu0 %v89
    %125 = vmatprep.subr.mxu0 0.0
    %126 = vmatpush1.msra.mxu0 %v90
    %127 = vmatprep.subr.mxu0 0.0
    %128 = vmatpush1.msra.mxu0 0.0
    %129 = vmatprep.subr.mxu0 0.0
    %130 = vmatpush1.msra.mxu0 0.0
    %131 = vmatprep.subr.mxu0 0.0
    %132 = vmatpush1.msra.mxu0 0.0
    %133 = vmatprep.subr.mxu0 0.0
    %134 = vmatpush1.msra.mxu0 0.0
    %135 = vmatprep.subr.mxu0 0.0
    %136 = vmatpush1.msra.mxu0 0.0
    %137 = vmatprep.subr.mxu0 0.0
    %138 = vmatpush1.msra.mxu0 0.0
    %139 = vmatprep.subr.mxu0 0.0
    %140 = vmatpush1.msra.mxu0 0.0
    %141 = vmatprep.subr.mxu0 0.0
    %142 = vmatpush1.msra.mxu0 0.0
    %143 = vmatprep.subr.mxu0 0.0
    %144 = vmatpush1.msra.mxu0 0.0
    %145 = vmatprep.subr.mxu0 0.0
    %146 = vmatpush1.msra.mxu0 0.0
    %147 = vmatprep.subr.mxu0 0.0
    %148 = vmatpush1.msra.mxu0 0.0
    %149 = vmatprep.subr.mxu0 0.0
    %150 = vmatpush1.msra.mxu0 0.0
    %151 = vmatprep.subr.mxu0 0.0
    %152 = vmatpush1.msra.mxu0 0.0
    %153 = vmatprep.subr.mxu0 0.0
    %154 = vmatpush1.msra.mxu0 0.0
    %155 = vmatprep.subr.mxu0 0.0
    %156 = vmatpush1.msra.mxu0 0.0
    %157 = vmatprep.subr.mxu0 0.0
    %158 = vmatpush1.msra.mxu0 0.0
    %159 = vmatprep.mubr.f32.mxu0 0.0
    %160 = vmatmul.mubr.f32.gmra.mrb[0].mxu0 %v91
    %v161 = vpop.f32.mrb[0].mxu0
    %v162 = vadd.f32 0.0, %v161
    %v163 = vpop.f32.mrb[0].mxu0
    %164 = vmatprep.mubr.f32.mxu0 0.0
    %165 = vmatmul.mubr.f32.gmra.mrb[0].mxu0 %v92
    %v166 = vpop.f32.mrb[0].mxu0
    %v167 = vadd.f32 0.0, %v166
    %v168 = vpop.f32.mrb[0].mxu0
    %169 = vdwg.mxu0
    %vm170 = vcmask 130048
    %v172 = vsel %vm170, %v73, 0
    %v175 = vsel %vm170, %v74, 0
    %177 = vmatprep.subr.mxu0 0.0
    %178 = vmatpush1.msra.mxu0 %v162
    %179 = vmatprep.subr.mxu0 0.0
    %180 = vmatpush1.msra.mxu0 %v167
    %181 = vmatprep.subr.mxu0 0.0
    %182 = vmatpush1.msra.mxu0 0.0
    %183 = vmatprep.subr.mxu0 0.0
    %184 = vmatpush1.msra.mxu0 0.0
    %185 = vmatprep.subr.mxu0 0.0
    %186 = vmatpush1.msra.mxu0 0.0
    %187 = vmatprep.subr.mxu0 0.0
    %188 = vmatpush1.msra.mxu0 0.0
    %189 = vmatprep.subr.mxu0 0.0
    %190 = vmatpush1.msra.mxu0 0.0
    %191 = vmatprep.subr.mxu0 0.0
    %192 = vmatpush1.msra.mxu0 0.0
    %193 = vmatprep.subr.mxu0 0.0
    %194 = vmatpush1.msra.mxu0 0.0
    %195 = vmatprep.subr.mxu0 0.0
    %196 = vmatpush1.msra.mxu0 0.0
    %197 = vmatprep.subr.mxu0 0.0
    %198 = vmatpush1.msra.mxu0 0.0
    %199 = vmatprep.subr.mxu0 0.0
    %200 = vmatpush1.msra.mxu0 0.0
    %201 = vmatprep.subr.mxu0 0.0
    %202 = vmatpush1.msra.mxu0 0.0
    %203 = vmatprep.subr.mxu0 0.0
    %204 = vmatpush1.msra.mxu0 0.0
    %205 = vmatprep.subr.mxu0 0.0
    %206 = vmatpush1.msra.mxu0 0.0
    %207 = vmatprep.subr.mxu0 0.0
    %208 = vmatpush1.msra.mxu0 0.0
    %209 = vmatprep.subr.mxu0 0.0
    %210 = vmatpush1.msra.mxu0 0.0
    %211 = vmatprep.subr.mxu0 0.0
    %212 = vmatpush1.msra.mxu0 0.0
    %213 = vmatprep.subr.mxu0 0.0
    %214 = vmatpush1.msra.mxu0 0.0
    %215 = vmatprep.subr.mxu0 0.0
    %216 = vmatpush1.msra.mxu0 0.0
    %217 = vmatprep.subr.mxu0 0.0
    %218 = vmatpush1.msra.mxu0 0.0
    %219 = vmatprep.subr.mxu0 0.0
    %220 = vmatpush1.msra.mxu0 0.0
    %221 = vmatprep.subr.mxu0 0.0
    %222 = vmatpush1.msra.mxu0 0.0
    %223 = vmatprep.subr.mxu0 0.0
    %224 = vmatpush1.msra.mxu0 0.0
    %225 = vmatprep.subr.mxu0 0.0
    %226 = vmatpush1.msra.mxu0 0.0
    %227 = vmatprep.subr.mxu0 0.0
    %228 = vmatpush1.msra.mxu0 0.0
    %229 = vmatprep.subr.mxu0 0.0
    %230 = vmatpush1.msra.mxu0 0.0
    %231 = vmatprep.subr.mxu0 0.0
    %232 = vmatpush1.msra.mxu0 0.0
    %233 = vmatprep.subr.mxu0 0.0
    %234 = vmatpush1.msra.mxu0 0.0
    %235 = vmatprep.subr.mxu0 0.0
    %236 = vmatpush1.msra.mxu0 0.0
    %237 = vmatprep.subr.mxu0 0.0
    %238 = vmatpush1.msra.mxu0 0.0
    %239 = vmatprep.subr.mxu0 0.0
    %240 = vmatpush1.msra.mxu0 0.0
    %241 = vmatprep.mubr.f32.mxu0 0.0
    %242 = vmatmul.mubr.f32.gmra.mrb[0].mxu0 %v172
    %v243 = vpop.f32.mrb[0].mxu0
    %v244 = vadd.f32 0.0, %v243
    %v245 = vpop.f32.mrb[0].mxu0
    %246 = vmatprep.mubr.f32.mxu0 0.0
    %247 = vmatmul.mubr.f32.gmra.mrb[0].mxu0 %v175
    %v248 = vpop.f32.mrb[0].mxu0
    %v249 = vadd.f32 0.0, %v248
    %v250 = vpop.f32.mrb[0].mxu0
    %251 = vdwg.mxu0
    %252 = vmatprep.subr.mxu0 0.0
    %253 = vmatpush1.msra.mxu0 %v75
    %254 = vmatprep.subr.mxu0 0.0
    %255 = vmatpush1.msra.mxu0 %v76
    %256 = vmatprep.subr.mxu0 0.0
    %257 = vmatpush1.msra.mxu0 %v77
    %258 = vmatprep.subr.mxu0 0.0
    %259 = vmatpush1.msra.mxu0 %v78
    %260 = vmatprep.subr.mxu0 0.0
    %261 = vmatpush1.msra.mxu0 %v79
    %262 = vmatprep.subr.mxu0 0.0
    %263 = vmatpush1.msra.mxu0 %v80
    %264 = vmatprep.subr.mxu0 0.0
    %265 = vmatpush1.msra.mxu0 %v81
    %266 = vmatprep.subr.mxu0 0.0
    %267 = vmatpush1.msra.mxu0 %v82
    %268 = vmatprep.subr.mxu0 0.0
    %269 = vmatpush1.msra.mxu0 %v83
    %270 = vmatprep.subr.mxu0 0.0
    %271 = vmatpush1.msra.mxu0 %v84
    %272 = vmatprep.subr.mxu0 0.0
    %273 = vmatpush1.msra.mxu0 %v85
    %274 = vmatprep.subr.mxu0 0.0
    %275 = vmatpush1.msra.mxu0 %v86
    %276 = vmatprep.subr.mxu0 0.0
    %277 = vmatpush1.msra.mxu0 %v87
    %278 = vmatprep.subr.mxu0 0.0
    %279 = vmatpush1.msra.mxu0 %v88
    %280 = vmatprep.subr.mxu0 0.0
    %281 = vmatpush1.msra.mxu0 %v89
    %282 = vmatprep.subr.mxu0 0.0
    %283 = vmatpush1.msra.mxu0 %v90
    %284 = vmatprep.subr.mxu0 0.0
    %285 = vmatpush1.msra.mxu0 0.0
    %286 = vmatprep.subr.mxu0 0.0
    %287 = vmatpush1.msra.mxu0 0.0
    %288 = vmatprep.subr.mxu0 0.0
    %289 = vmatpush1.msra.mxu0 0.0
    %290 = vmatprep.subr.mxu0 0.0
    %291 = vmatpush1.msra.mxu0 0.0
    %292 = vmatprep.subr.mxu0 0.0
    %293 = vmatpush1.msra.mxu0 0.0
    %294 = vmatprep.subr.mxu0 0.0
    %295 = vmatpush1.msra.mxu0 0.0
    %296 = vmatprep.subr.mxu0 0.0
    %297 = vmatpush1.msra.mxu0 0.0
    %298 = vmatprep.subr.mxu0 0.0
    %299 = vmatpush1.msra.mxu0 0.0
    %300 = vmatprep.subr.mxu0 0.0
    %301 = vmatpush1.msra.mxu0 0.0
    %302 = vmatprep.subr.mxu0 0.0
    %303 = vmatpush1.msra.mxu0 0.0
    %304 = vmatprep.subr.mxu0 0.0
    %305 = vmatpush1.msra.mxu0 0.0
    %306 = vmatprep.subr.mxu0 0.0
    %307 = vmatpush1.msra.mxu0 0.0
    %308 = vmatprep.subr.mxu0 0.0
    %309 = vmatpush1.msra.mxu0 0.0
    %310 = vmatprep.subr.mxu0 0.0
    %311 = vmatpush1.msra.mxu0 0.0
    %312 = vmatprep.subr.mxu0 0.0
    %313 = vmatpush1.msra.mxu0 0.0
    %314 = vmatprep.subr.mxu0 0.0
    %315 = vmatpush1.msra.mxu0 0.0
    %316 = vmatprep.mubr.f32.mxu0 0.0
    %317 = vmatmul.mubr.f32.gmra.mrb[0].mxu0 %v93
    %v318 = vpop.f32.mrb[0].mxu0
    %v319 = vadd.f32 0.0, %v318
    %v320 = vpop.f32.mrb[0].mxu0
    %321 = vmatprep.mubr.f32.mxu0 0.0
    %322 = vmatmul.mubr.f32.gmra.mrb[0].mxu0 %v94
    %v323 = vpop.f32.mrb[0].mxu0
    %v324 = vadd.f32 0.0, %v323
    %v325 = vpop.f32.mrb[0].mxu0
    %326 = vdwg.mxu0
    %327 = vmatprep.subr.mxu0 0.0
    %328 = vmatpush1.msra.mxu0 %v319
    %329 = vmatprep.subr.mxu0 0.0
    %330 = vmatpush1.msra.mxu0 %v324
    %331 = vmatprep.subr.mxu0 0.0
    %332 = vmatpush1.msra.mxu0 0.0
    %333 = vmatprep.subr.mxu0 0.0
    %334 = vmatpush1.msra.mxu0 0.0
    %335 = vmatprep.subr.mxu0 0.0
    %336 = vmatpush1.msra.mxu0 0.0
    %337 = vmatprep.subr.mxu0 0.0
    %338 = vmatpush1.msra.mxu0 0.0
    %339 = vmatprep.subr.mxu0 0.0
    %340 = vmatpush1.msra.mxu0 0.0
    %341 = vmatprep.subr.mxu0 0.0
    %342 = vmatpush1.msra.mxu0 0.0
    %343 = vmatprep.subr.mxu0 0.0
    %344 = vmatpush1.msra.mxu0 0.0
    %345 = vmatprep.subr.mxu0 0.0
    %346 = vmatpush1.msra.mxu0 0.0
    %347 = vmatprep.subr.mxu0 0.0
    %348 = vmatpush1.msra.mxu0 0.0
    %349 = vmatprep.subr.mxu0 0.0
    %350 = vmatpush1.msra.mxu0 0.0
    %351 = vmatprep.subr.mxu0 0.0
    %352 = vmatpush1.msra.mxu0 0.0
    %353 = vmatprep.subr.mxu0 0.0
    %354 = vmatpush1.msra.mxu0 0.0
    %355 = vmatprep.subr.mxu0 0.0
    %356 = vmatpush1.msra.mxu0 0.0
    %357 = vmatprep.subr.mxu0 0.0
    %358 = vmatpush1.msra.mxu0 0.0
    %359 = vmatprep.subr.mxu0 0.0
    %360 = vmatpush1.msra.mxu0 0.0
    %361 = vmatprep.subr.mxu0 0.0
    %362 = vmatpush1.msra.mxu0 0.0
    %363 = vmatprep.subr.mxu0 0.0
    %364 = vmatpush1.msra.mxu0 0.0
    %365 = vmatprep.subr.mxu0 0.0
    %366 = vmatpush1.msra.mxu0 0.0
    %367 = vmatprep.subr.mxu0 0.0
    %368 = vmatpush1.msra.mxu0 0.0
    %369 = vmatprep.subr.mxu0 0.0
    %370 = vmatpush1.msra.mxu0 0.0
    %371 = vmatprep.subr.mxu0 0.0
    %372 = vmatpush1.msra.mxu0 0.0
    %373 = vmatprep.subr.mxu0 0.0
    %374 = vmatpush1.msra.mxu0 0.0
    %375 = vmatprep.subr.mxu0 0.0
    %376 = vmatpush1.msra.mxu0 0.0
    %377 = vmatprep.subr.mxu0 0.0
    %378 = vmatpush1.msra.mxu0 0.0
    %379 = vmatprep.subr.mxu0 0.0
    %380 = vmatpush1.msra.mxu0 0.0
    %381 = vmatprep.subr.mxu0 0.0
    %382 = vmatpush1.msra.mxu0 0.0
    %383 = vmatprep.subr.mxu0 0.0
    %384 = vmatpush1.msra.mxu0 0.0
    %385 = vmatprep.subr.mxu0 0.0
    %386 = vmatpush1.msra.mxu0 0.0
    %387 = vmatprep.subr.mxu0 0.0
    %388 = vmatpush1.msra.mxu0 0.0
    %389 = vmatprep.subr.mxu0 0.0
    %390 = vmatpush1.msra.mxu0 0.0
    %391 = vmatprep.mubr.f32.mxu0 0.0
    %392 = vmatmul.mubr.f32.gmra.mrb[0].mxu0 %v172
    %v393 = vpop.f32.mrb[0].mxu0
    %v394 = vadd.f32 0.0, %v393
    %v395 = vpop.f32.mrb[0].mxu0
    %396 = vmatprep.mubr.f32.mxu0 0.0
    %397 = vmatmul.mubr.f32.gmra.mrb[0].mxu0 %v175
    %v398 = vpop.f32.mrb[0].mxu0
    %v399 = vadd.f32 0.0, %v398
    %v400 = vpop.f32.mrb[0].mxu0
    %401 = vdwg.mxu0
    %v402 = vmul.f32 %v91, %v91
    %v403 = vmul.f32 %v92, %v92
    %404 = vmatprep.subr.mxu0 0.0
    %405 = vmatpush1.msra.mxu0 %v75
    %406 = vmatprep.subr.mxu0 0.0
    %407 = vmatpush1.msra.mxu0 %v76
    %408 = vmatprep.subr.mxu0 0.0
    %409 = vmatpush1.msra.mxu0 %v77
    %410 = vmatprep.subr.mxu0 0.0
    %411 = vmatpush1.msra.mxu0 %v78
    %412 = vmatprep.subr.mxu0 0.0
    %413 = vmatpush1.msra.mxu0 %v79
    %414 = vmatprep.subr.mxu0 0.0
    %415 = vmatpush1.msra.mxu0 %v80
    %416 = vmatprep.subr.mxu0 0.0
    %417 = vmatpush1.msra.mxu0 %v81
    %418 = vmatprep.subr.mxu0 0.0
    %419 = vmatpush1.msra.mxu0 %v82
    %420 = vmatprep.subr.mxu0 0.0
    %421 = vmatpush1.msra.mxu0 %v83
    %422 = vmatprep.subr.mxu0 0.0
    %423 = vmatpush1.msra.mxu0 %v84
    %424 = vmatprep.subr.mxu0 0.0
    %425 = vmatpush1.msra.mxu0 %v85
    %426 = vmatprep.subr.mxu0 0.0
    %427 = vmatpush1.msra.mxu0 %v86
    %428 = vmatprep.subr.mxu0 0.0
    %429 = vmatpush1.msra.mxu0 %v87
    %430 = vmatprep.subr.mxu0 0.0
    %431 = vmatpush1.msra.mxu0 %v88
    %432 = vmatprep.subr.mxu0 0.0
    %433 = vmatpush1.msra.mxu0 %v89
    %434 = vmatprep.subr.mxu0 0.0
    %435 = vmatpush1.msra.mxu0 %v90
    %436 = vmatprep.subr.mxu0 0.0
    %437 = vmatpush1.msra.mxu0 0.0
    %438 = vmatprep.subr.mxu0 0.0
    %439 = vmatpush1.msra.mxu0 0.0
    %440 = vmatprep.subr.mxu0 0.0
    %441 = vmatpush1.msra.mxu0 0.0
    %442 = vmatprep.subr.mxu0 0.0
    %443 = vmatpush1.msra.mxu0 0.0
    %444 = vmatprep.subr.mxu0 0.0
    %445 = vmatpush1.msra.mxu0 0.0
    %446 = vmatprep.subr.mxu0 0.0
    %447 = vmatpush1.msra.mxu0 0.0
    %448 = vmatprep.subr.mxu0 0.0
    %449 = vmatpush1.msra.mxu0 0.0
    %450 = vmatprep.subr.mxu0 0.0
    %451 = vmatpush1.msra.mxu0 0.0
    %452 = vmatprep.subr.mxu0 0.0
    %453 = vmatpush1.msra.mxu0 0.0
    %454 = vmatprep.subr.mxu0 0.0
    %455 = vmatpush1.msra.mxu0 0.0
    %456 = vmatprep.subr.mxu0 0.0
    %457 = vmatpush1.msra.mxu0 0.0
    %458 = vmatprep.subr.mxu0 0.0
    %459 = vmatpush1.msra.mxu0 0.0
    %460 = vmatprep.subr.mxu0 0.0
    %461 = vmatpush1.msra.mxu0 0.0
    %462 = vmatprep.subr.mxu0 0.0
    %463 = vmatpush1.msra.mxu0 0.0
    %464 = vmatprep.subr.mxu0 0.0
    %465 = vmatpush1.msra.mxu0 0.0
    %466 = vmatprep.subr.mxu0 0.0
    %467 = vmatpush1.msra.mxu0 0.0
    %468 = vmatprep.mubr.f32.mxu0 0.0
    %469 = vmatmul.mubr.f32.gmra.mrb[0].mxu0 %v402
    %v470 = vpop.f32.mrb[0].mxu0
    %v471 = vadd.f32 0.0, %v470
    %v472 = vpop.f32.mrb[0].mxu0
    %473 = vmatprep.mubr.f32.mxu0 0.0
    %474 = vmatmul.mubr.f32.gmra.mrb[0].mxu0 %v403
    %v475 = vpop.f32.mrb[0].mxu0
    %v476 = vadd.f32 0.0, %v475
    %v477 = vpop.f32.mrb[0].mxu0
    %478 = vdwg.mxu0
    %479 = vmatprep.subr.mxu0 0.0
    %480 = vmatpush1.msra.mxu0 %v471
    %481 = vmatprep.subr.mxu0 0.0
    %482 = vmatpush1.msra.mxu0 %v476
    %483 = vmatprep.subr.mxu0 0.0
    %484 = vmatpush1.msra.mxu0 0.0
    %485 = vmatprep.subr.mxu0 0.0
    %486 = vmatpush1.msra.mxu0 0.0
    %487 = vmatprep.subr.mxu0 0.0
    %488 = vmatpush1.msra.mxu0 0.0
    %489 = vmatprep.subr.mxu0 0.0
    %490 = vmatpush1.msra.mxu0 0.0
    %491 = vmatprep.subr.mxu0 0.0
    %492 = vmatpush1.msra.mxu0 0.0
    %493 = vmatprep.subr.mxu0 0.0
    %494 = vmatpush1.msra.mxu0 0.0
    %495 = vmatprep.subr.mxu0 0.0
    %496 = vmatpush1.msra.mxu0 0.0
    %497 = vmatprep.subr.mxu0 0.0
    %498 = vmatpush1.msra.mxu0 0.0
    %499 = vmatprep.subr.mxu0 0.0
    %500 = vmatpush1.msra.mxu0 0.0
    %501 = vmatprep.subr.mxu0 0.0
    %502 = vmatpush1.msra.mxu0 0.0
    %503 = vmatprep.subr.mxu0 0.0
    %504 = vmatpush1.msra.mxu0 0.0
    %505 = vmatprep.subr.mxu0 0.0
    %506 = vmatpush1.msra.mxu0 0.0
    %507 = vmatprep.subr.mxu0 0.0
    %508 = vmatpush1.msra.mxu0 0.0
    %509 = vmatprep.subr.mxu0 0.0
    %510 = vmatpush1.msra.mxu0 0.0
    %511 = vmatprep.subr.mxu0 0.0
    %512 = vmatpush1.msra.mxu0 0.0
    %513 = vmatprep.subr.mxu0 0.0
    %514 = vmatpush1.msra.mxu0 0.0
    %515 = vmatprep.subr.mxu0 0.0
    %516 = vmatpush1.msra.mxu0 0.0
    %517 = vmatprep.subr.mxu0 0.0
    %518 = vmatpush1.msra.mxu0 0.0
    %519 = vmatprep.subr.mxu0 0.0
    %520 = vmatpush1.msra.mxu0 0.0
    %521 = vmatprep.subr.mxu0 0.0
    %522 = vmatpush1.msra.mxu0 0.0
    %523 = vmatprep.subr.mxu0 0.0
    %524 = vmatpush1.msra.mxu0 0.0
    %525 = vmatprep.subr.mxu0 0.0
    %526 = vmatpush1.msra.mxu0 0.0
    %527 = vmatprep.subr.mxu0 0.0
    %528 = vmatpush1.msra.mxu0 0.0
    %529 = vmatprep.subr.mxu0 0.0
    %530 = vmatpush1.msra.mxu0 0.0
    %531 = vmatprep.subr.mxu0 0.0
    %532 = vmatpush1.msra.mxu0 0.0
    %533 = vmatprep.subr.mxu0 0.0
    %534 = vmatpush1.msra.mxu0 0.0
    %535 = vmatprep.subr.mxu0 0.0
    %536 = vmatpush1.msra.mxu0 0.0
    %537 = vmatprep.subr.mxu0 0.0
    %538 = vmatpush1.msra.mxu0 0.0
    %539 = vmatprep.subr.mxu0 0.0
    %540 = vmatpush1.msra.mxu0 0.0
    %541 = vmatprep.subr.mxu0 0.0
    %542 = vmatpush1.msra.mxu0 0.0
    %543 = vmatprep.mubr.f32.mxu0 0.0
    %544 = vmatmul.mubr.f32.gmra.mrb[0].mxu0 %v172
    %v545 = vpop.f32.mrb[0].mxu0
    %v546 = vadd.f32 0.0, %v545
    %v547 = vpop.f32.mrb[0].mxu0
    %548 = vmatprep.mubr.f32.mxu0 0.0
    %549 = vmatmul.mubr.f32.gmra.mrb[0].mxu0 %v175
    %v550 = vpop.f32.mrb[0].mxu0
    %v551 = vadd.f32 0.0, %v550
    %v552 = vpop.f32.mrb[0].mxu0
    %553 = vdwg.mxu0
    %v554 = vmul.f32 %v93, %v93
    %v555 = vmul.f32 %v94, %v94
    %556 = vmatprep.subr.mxu0 0.0
    %557 = vmatpush1.msra.mxu0 %v75
    %558 = vmatprep.subr.mxu0 0.0
    %559 = vmatpush1.msra.mxu0 %v76
    %560 = vmatprep.subr.mxu0 0.0
    %561 = vmatpush1.msra.mxu0 %v77
    %562 = vmatprep.subr.mxu0 0.0
    %563 = vmatpush1.msra.mxu0 %v78
    %564 = vmatprep.subr.mxu0 0.0
    %565 = vmatpush1.msra.mxu0 %v79
    %566 = vmatprep.subr.mxu0 0.0
    %567 = vmatpush1.msra.mxu0 %v80
    %568 = vmatprep.subr.mxu0 0.0
    %569 = vmatpush1.msra.mxu0 %v81
    %570 = vmatprep.subr.mxu0 0.0
    %571 = vmatpush1.msra.mxu0 %v82
    %572 = vmatprep.subr.mxu0 0.0
    %573 = vmatpush1.msra.mxu0 %v83
    %574 = vmatprep.subr.mxu0 0.0
    %575 = vmatpush1.msra.mxu0 %v84
    %576 = vmatprep.subr.mxu0 0.0
    %577 = vmatpush1.msra.mxu0 %v85
    %578 = vmatprep.subr.mxu0 0.0
    %579 = vmatpush1.msra.mxu0 %v86
    %580 = vmatprep.subr.mxu0 0.0
    %581 = vmatpush1.msra.mxu0 %v87
    %582 = vmatprep.subr.mxu0 0.0
    %583 = vmatpush1.msra.mxu0 %v88
    %584 = vmatprep.subr.mxu0 0.0
    %585 = vmatpush1.msra.mxu0 %v89
    %586 = vmatprep.subr.mxu0 0.0
    %587 = vmatpush1.msra.mxu0 %v90
    %588 = vmatprep.subr.mxu0 0.0
    %589 = vmatpush1.msra.mxu0 0.0
    %590 = vmatprep.subr.mxu0 0.0
    %591 = vmatpush1.msra.mxu0 0.0
    %592 = vmatprep.subr.mxu0 0.0
    %593 = vmatpush1.msra.mxu0 0.0
    %594 = vmatprep.subr.mxu0 0.0
    %595 = vmatpush1.msra.mxu0 0.0
    %596 = vmatprep.subr.mxu0 0.0
    %597 = vmatpush1.msra.mxu0 0.0
    %598 = vmatprep.subr.mxu0 0.0
    %599 = vmatpush1.msra.mxu0 0.0
    %600 = vmatprep.subr.mxu0 0.0
    %601 = vmatpush1.msra.mxu0 0.0
    %602 = vmatprep.subr.mxu0 0.0
    %603 = vmatpush1.msra.mxu0 0.0
    %604 = vmatprep.subr.mxu0 0.0
    %605 = vmatpush1.msra.mxu0 0.0
    %606 = vmatprep.subr.mxu0 0.0
    %607 = vmatpush1.msra.mxu0 0.0
    %608 = vmatprep.subr.mxu0 0.0
    %609 = vmatpush1.msra.mxu0 0.0
    %610 = vmatprep.subr.mxu0 0.0
    %611 = vmatpush1.msra.mxu0 0.0
    %612 = vmatprep.subr.mxu0 0.0
    %613 = vmatpush1.msra.mxu0 0.0
    %614 = vmatprep.subr.mxu0 0.0
    %615 = vmatpush1.msra.mxu0 0.0
    %616 = vmatprep.subr.mxu0 0.0
    %617 = vmatpush1.msra.mxu0 0.0
    %618 = vmatprep.subr.mxu0 0.0
    %619 = vmatpush1.msra.mxu0 0.0
    %620 = vmatprep.mubr.f32.mxu0 0.0
    %621 = vmatmul.mubr.f32.gmra.mrb[0].mxu0 %v554
    %v622 = vpop.f32.mrb[0].mxu0
    %v623 = vadd.f32 0.0, %v622
    %v624 = vpop.f32.mrb[0].mxu0
    %625 = vmatprep.mubr.f32.mxu0 0.0
    %626 = vmatmul.mubr.f32.gmra.mrb[0].mxu0 %v555
    %v627 = vpop.f32.mrb[0].mxu0
    %v628 = vadd.f32 0.0, %v627
    %v629 = vpop.f32.mrb[0].mxu0
    %630 = vdwg.mxu0
    %631 = vmatprep.subr.mxu0 0.0
    %632 = vmatpush1.msra.mxu0 %v623
    %633 = vmatprep.subr.mxu0 0.0
    %634 = vmatpush1.msra.mxu0 %v628
    %635 = vmatprep.subr.mxu0 0.0
    %636 = vmatpush1.msra.mxu0 0.0
    %637 = vmatprep.subr.mxu0 0.0
    %638 = vmatpush1.msra.mxu0 0.0
    %639 = vmatprep.subr.mxu0 0.0
    %640 = vmatpush1.msra.mxu0 0.0
    %641 = vmatprep.subr.mxu0 0.0
    %642 = vmatpush1.msra.mxu0 0.0
    %643 = vmatprep.subr.mxu0 0.0
    %644 = vmatpush1.msra.mxu0 0.0
    %645 = vmatprep.subr.mxu0 0.0
    %646 = vmatpush1.msra.mxu0 0.0
    %647 = vmatprep.subr.mxu0 0.0
    %648 = vmatpush1.msra.mxu0 0.0
    %649 = vmatprep.subr.mxu0 0.0
    %650 = vmatpush1.msra.mxu0 0.0
    %651 = vmatprep.subr.mxu0 0.0
    %652 = vmatpush1.msra.mxu0 0.0
    %653 = vmatprep.subr.mxu0 0.0
    %654 = vmatpush1.msra.mxu0 0.0
    %655 = vmatprep.subr.mxu0 0.0
    %656 = vmatpush1.msra.mxu0 0.0
    %657 = vmatprep.subr.mxu0 0.0
    %658 = vmatpush1.msra.mxu0 0.0
    %659 = vmatprep.subr.mxu0 0.0
    %660 = vmatpush1.msra.mxu0 0.0
    %661 = vmatprep.subr.mxu0 0.0
    %662 = vmatpush1.msra.mxu0 0.0
    %663 = vmatprep.subr.mxu0 0.0
    %664 = vmatpush1.msra.mxu0 0.0
    %665 = vmatprep.subr.mxu0 0.0
    %666 = vmatpush1.msra.mxu0 0.0
    %667 = vmatprep.subr.mxu0 0.0
    %668 = vmatpush1.msra.mxu0 0.0
    %669 = vmatprep.subr.mxu0 0.0
    %670 = vmatpush1.msra.mxu0 0.0
    %671 = vmatprep.subr.mxu0 0.0
    %672 = vmatpush1.msra.mxu0 0.0
    %673 = vmatprep.subr.mxu0 0.0
    %674 = vmatpush1.msra.mxu0 0.0
    %675 = vmatprep.subr.mxu0 0.0
    %676 = vmatpush1.msra.mxu0 0.0
    %677 = vmatprep.subr.mxu0 0.0
    %678 = vmatpush1.msra.mxu0 0.0
    %679 = vmatprep.subr.mxu0 0.0
    %680 = vmatpush1.msra.mxu0 0.0
    %681 = vmatprep.subr.mxu0 0.0
    %682 = vmatpush1.msra.mxu0 0.0
    %683 = vmatprep.subr.mxu0 0.0
    %684 = vmatpush1.msra.mxu0 0.0
    %685 = vmatprep.subr.mxu0 0.0
    %686 = vmatpush1.msra.mxu0 0.0
    %687 = vmatprep.subr.mxu0 0.0
    %688 = vmatpush1.msra.mxu0 0.0
    %689 = vmatprep.subr.mxu0 0.0
    %690 = vmatpush1.msra.mxu0 0.0
    %691 = vmatprep.subr.mxu0 0.0
    %692 = vmatpush1.msra.mxu0 0.0
    %693 = vmatprep.subr.mxu0 0.0
    %694 = vmatpush1.msra.mxu0 0.0
    %695 = vmatprep.mubr.f32.mxu0 0.0
    %696 = vmatmul.mubr.f32.gmra.mrb[0].mxu0 %v172
    %v697 = vpop.f32.mrb[0].mxu0
    %v698 = vadd.f32 0.0, %v697
    %v699 = vpop.f32.mrb[0].mxu0
    %700 = vmatprep.mubr.f32.mxu0 0.0
    %701 = vmatmul.mubr.f32.gmra.mrb[0].mxu0 %v175
    %v702 = vpop.f32.mrb[0].mxu0
    %v703 = vadd.f32 0.0, %v702
    %v704 = vpop.f32.mrb[0].mxu0
    %705 = vdwg.mxu0
    %v706 = vmul.f32 %v91, %v93
    %v707 = vmul.f32 %v92, %v94
    %708 = vmatprep.subr.mxu0 0.0
    %709 = vmatpush1.msra.mxu0 %v75
    %710 = vmatprep.subr.mxu0 0.0
    %711 = vmatpush1.msra.mxu0 %v76
    %712 = vmatprep.subr.mxu0 0.0
    %713 = vmatpush1.msra.mxu0 %v77
    %714 = vmatprep.subr.mxu0 0.0
    %715 = vmatpush1.msra.mxu0 %v78
    %716 = vmatprep.subr.mxu0 0.0
    %717 = vmatpush1.msra.mxu0 %v79
    %718 = vmatprep.subr.mxu0 0.0
    %719 = vmatpush1.msra.mxu0 %v80
    %720 = vmatprep.subr.mxu0 0.0
    %721 = vmatpush1.msra.mxu0 %v81
    %722 = vmatprep.subr.mxu0 0.0
    %723 = vmatpush1.msra.mxu0 %v82
    %724 = vmatprep.subr.mxu0 0.0
    %725 = vmatpush1.msra.mxu0 %v83
    %726 = vmatprep.subr.mxu0 0.0
    %727 = vmatpush1.msra.mxu0 %v84
    %728 = vmatprep.subr.mxu0 0.0
    %729 = vmatpush1.msra.mxu0 %v85
    %730 = vmatprep.subr.mxu0 0.0
    %731 = vmatpush1.msra.mxu0 %v86
    %732 = vmatprep.subr.mxu0 0.0
    %733 = vmatpush1.msra.mxu0 %v87
    %734 = vmatprep.subr.mxu0 0.0
    %735 = vmatpush1.msra.mxu0 %v88
    %736 = vmatprep.subr.mxu0 0.0
    %737 = vmatpush1.msra.mxu0 %v89
    %738 = vmatprep.subr.mxu0 0.0
    %739 = vmatpush1.msra.mxu0 %v90
    %740 = vmatprep.subr.mxu0 0.0
    %741 = vmatpush1.msra.mxu0 0.0
    %742 = vmatprep.subr.mxu0 0.0
    %743 = vmatpush1.msra.mxu0 0.0
    %744 = vmatprep.subr.mxu0 0.0
    %745 = vmatpush1.msra.mxu0 0.0
    %746 = vmatprep.subr.mxu0 0.0
    %747 = vmatpush1.msra.mxu0 0.0
    %748 = vmatprep.subr.mxu0 0.0
    %749 = vmatpush1.msra.mxu0 0.0
    %750 = vmatprep.subr.mxu0 0.0
    %751 = vmatpush1.msra.mxu0 0.0
    %752 = vmatprep.subr.mxu0 0.0
    %753 = vmatpush1.msra.mxu0 0.0
    %754 = vmatprep.subr.mxu0 0.0
    %755 = vmatpush1.msra.mxu0 0.0
    %756 = vmatprep.subr.mxu0 0.0
    %757 = vmatpush1.msra.mxu0 0.0
    %758 = vmatprep.subr.mxu0 0.0
    %759 = vmatpush1.msra.mxu0 0.0
    %760 = vmatprep.subr.mxu0 0.0
    %761 = vmatpush1.msra.mxu0 0.0
    %762 = vmatprep.subr.mxu0 0.0
    %763 = vmatpush1.msra.mxu0 0.0
    %764 = vmatprep.subr.mxu0 0.0
    %765 = vmatpush1.msra.mxu0 0.0
    %766 = vmatprep.subr.mxu0 0.0
    %767 = vmatpush1.msra.mxu0 0.0
    %768 = vmatprep.subr.mxu0 0.0
    %769 = vmatpush1.msra.mxu0 0.0
    %770 = vmatprep.subr.mxu0 0.0
    %771 = vmatpush1.msra.mxu0 0.0
    %772 = vmatprep.mubr.f32.mxu0 0.0
    %773 = vmatmul.mubr.f32.gmra.mrb[0].mxu0 %v706
    %v774 = vpop.f32.mrb[0].mxu0
    %v775 = vadd.f32 0.0, %v774
    %v776 = vpop.f32.mrb[0].mxu0
    %777 = vmatprep.mubr.f32.mxu0 0.0
    %778 = vmatmul.mubr.f32.gmra.mrb[0].mxu0 %v707
    %v779 = vpop.f32.mrb[0].mxu0
    %v780 = vadd.f32 0.0, %v779
    %v781 = vpop.f32.mrb[0].mxu0
    %782 = vdwg.mxu0
    %783 = vmatprep.subr.mxu0 0.0
    %784 = vmatpush1.msra.mxu0 %v775
    %785 = vmatprep.subr.mxu0 0.0
    %786 = vmatpush1.msra.mxu0 %v780
    %787 = vmatprep.subr.mxu0 0.0
    %788 = vmatpush1.msra.mxu0 0.0
    %789 = vmatprep.subr.mxu0 0.0
    %790 = vmatpush1.msra.mxu0 0.0
    %791 = vmatprep.subr.mxu0 0.0
    %792 = vmatpush1.msra.mxu0 0.0
    %793 = vmatprep.subr.mxu0 0.0
    %794 = vmatpush1.msra.mxu0 0.0
    %795 = vmatprep.subr.mxu0 0.0
    %796 = vmatpush1.msra.mxu0 0.0
    %797 = vmatprep.subr.mxu0 0.0
    %798 = vmatpush1.msra.mxu0 0.0
    %799 = vmatprep.subr.mxu0 0.0
    %800 = vmatpush1.msra.mxu0 0.0
    %801 = vmatprep.subr.mxu0 0.0
    %802 = vmatpush1.msra.mxu0 0.0
    %803 = vmatprep.subr.mxu0 0.0
    %804 = vmatpush1.msra.mxu0 0.0
    %805 = vmatprep.subr.mxu0 0.0
    %806 = vmatpush1.msra.mxu0 0.0
    %807 = vmatprep.subr.mxu0 0.0
    %808 = vmatpush1.msra.mxu0 0.0
    %809 = vmatprep.subr.mxu0 0.0
    %810 = vmatpush1.msra.mxu0 0.0
    %811 = vmatprep.subr.mxu0 0.0
    %812 = vmatpush1.msra.mxu0 0.0
    %813 = vmatprep.subr.mxu0 0.0
    %814 = vmatpush1.msra.mxu0 0.0
    %815 = vmatprep.subr.mxu0 0.0
    %816 = vmatpush1.msra.mxu0 0.0
    %817 = vmatprep.subr.mxu0 0.0
    %818 = vmatpush1.msra.mxu0 0.0
    %819 = vmatprep.subr.mxu0 0.0
    %820 = vmatpush1.msra.mxu0 0.0
    %821 = vmatprep.subr.mxu0 0.0
    %822 = vmatpush1.msra.mxu0 0.0
    %823 = vmatprep.subr.mxu0 0.0
    %824 = vmatpush1.msra.mxu0 0.0
    %825 = vmatprep.subr.mxu0 0.0
    %826 = vmatpush1.msra.mxu0 0.0
    %827 = vmatprep.subr.mxu0 0.0
    %828 = vmatpush1.msra.mxu0 0.0
    %829 = vmatprep.subr.mxu0 0.0
    %830 = vmatpush1.msra.mxu0 0.0
    %831 = vmatprep.subr.mxu0 0.0
    %832 = vmatpush1.msra.mxu0 0.0
    %833 = vmatprep.subr.mxu0 0.0
    %834 = vmatpush1.msra.mxu0 0.0
    %835 = vmatprep.subr.mxu0 0.0
    %836 = vmatpush1.msra.mxu0 0.0
    %837 = vmatprep.subr.mxu0 0.0
    %838 = vmatpush1.msra.mxu0 0.0
    %839 = vmatprep.subr.mxu0 0.0
    %840 = vmatpush1.msra.mxu0 0.0
    %841 = vmatprep.subr.mxu0 0.0
    %842 = vmatpush1.msra.mxu0 0.0
    %843 = vmatprep.subr.mxu0 0.0
    %844 = vmatpush1.msra.mxu0 0.0
    %845 = vmatprep.subr.mxu0 0.0
    %846 = vmatpush1.msra.mxu0 0.0
    %847 = vmatprep.mubr.f32.mxu0 0.0
    %848 = vmatmul.mubr.f32.gmra.mrb[0].mxu0 %v172
    %v849 = vpop.f32.mrb[0].mxu0
    %v850 = vadd.f32 0.0, %v849
    %v851 = vpop.f32.mrb[0].mxu0
    %852 = vmatprep.mubr.f32.mxu0 0.0
    %853 = vmatmul.mubr.f32.gmra.mrb[0].mxu0 %v175
    %v854 = vpop.f32.mrb[0].mxu0
    %v855 = vadd.f32 0.0, %v854
    %v856 = vpop.f32.mrb[0].mxu0
    %857 = vdwg.mxu0
    %v858 = vmul.f32 %v244, %v244
    %v859 = vmul.f32 %v249, %v249
    %v860 = vmul.f32 %v394, %v394
    %v861 = vmul.f32 %v399, %v399
    %v862 = vmul.f32 %v244, %v394
    %v863 = vmul.f32 %v249, %v399
    %v864 = vsub.f32 %v546, %v858
    %v865 = vsub.f32 %v551, %v859
    %v866 = vand.u32 2147483647, %v864
    %v867 = vand.u32 2147483647, %v865
    %v868 = vsub.f32 %v698, %v860
    %v869 = vsub.f32 %v703, %v861
    %v870 = vand.u32 2147483647, %v868
    %v871 = vand.u32 2147483647, %v869
    %v872 = vsub.f32 %v850, %v862
    %v873 = vsub.f32 %v855, %v863
    %v874 = vmul.f32 %v862, 2.0
    %v875 = vmul.f32 %v863, 2.0
    %v876 = vadd.f32 %v874, 0.0001
    %v877 = vadd.f32 %v875, 0.0001
    %v878 = vmul.f32 %v872, 2.0
    %v879 = vmul.f32 %v873, 2.0
    %v880 = vadd.f32 %v878, 0.0009
    %v881 = vadd.f32 %v879, 0.0009
    %v882 = vmul.f32 %v876, %v880
    %v883 = vmul.f32 %v877, %v881
    %v884 = vadd.f32 %v858, %v860
    %v885 = vadd.f32 %v859, %v861
    %v886 = vadd.f32 %v884, 0.0001
    %v887 = vadd.f32 %v885, 0.0001
    %v888 = vadd.f32 %v866, %v870
    %v889 = vadd.f32 %v867, %v871
    %v890 = vadd.f32 %v888, 0.0009
    %v891 = vadd.f32 %v889, 0.0009
    %v892 = vmul.f32 %v886, %v890
    %v893 = vmul.f32 %v887, %v891
    %v894 = vrcp.pop %v892
    %v895 = vrcp.pop %v893
    %v896 = vmul.f32 %v882, %v894
    %v897 = vmul.f32 %v883, %v895
    %v898 = vmax.f32 %v896, -1.0
    %v899 = vmax.f32 %v897, -1.0
    %v900 = vmin.f32 %v898, 1.0
    %v901 = vmin.f32 %v899, 1.0
    %v902 = vadd.f32 %v900, 1.0
    %v903 = vadd.f32 %v901, 1.0
    %v904 = vmul.f32 %v902, 0.5
    %v905 = vmul.f32 %v903, 0.5
    %v906 = vsub.f32 1.0, %v904
    %v907 = vsub.f32 1.0, %v905
    %908 = vst [vmem:[#allocation10] sm:$0xff] %v906
    %909 = vst [vmem:[#allocation10 + $0x8] sm:$0xff] %v907
    // Predicated region
    $region34: #{tpu_custom_call.1} parent=1 // pred_check
      _
    $region35: #{tpu_custom_call.1} parent=1 // pred_check_branch
      %911 = sbr.rel (0) target = $region37
    $region36: #{tpu_custom_call.1} parent=1 // pred_region
      %s913 = ssub.s32 256, 256
      %914 = vsyncadd [#allocation4], %s913
      %s915 = sshll.u32 [#allocation10], 4
      %s916 = int_to_ptr.vmem [resolvable:$true] %s915
      %921 = dma.vmem_to_hbm [thread:$0]  %s916, 256, %s4, [#allocation4], 128, 128, 8
    $region37: #{tpu_custom_call.1} parent=1 // pred_fallthru
      _
    // Predicated region
    $region38: #{tpu_custom_call.1} parent=1 // pred_check
      _
    $region39: #{tpu_custom_call.1} parent=1 // pred_check_branch
      %923 = sbr.rel (0) target = $region41
    $region40: #{tpu_custom_call.1} parent=1 // pred_region
      %924 = dma.done [#allocation4], 256
    $region41: #{tpu_custom_call.1} parent=1 // pred_fallthru
      _
    %925 = vsyncpa [#allocation3], 1
    %926 = vsyncpa [#allocation6], 1
    %927 = vsyncpa [#allocation9], 1
    %928 = vsyncpa [#allocation4], 1

</llo_original>
